<compile_context>
chip_gen: v6e
topology: v6e:2x2x1
jax: 0.10.0
libtpu: 0.0.40
codegen_flags: <defaults>
</compile_context>

<pallas_src>
import functools

import jax
import jax.numpy as jnp
from jax.experimental import pallas as pl
from jax.experimental.pallas import tpu as pltpu

BN_EPS = 1e-5


def _round_up(x, m):
    return (x + m - 1) // m * m


def _row_pad(m):
    # rows padded to a multiple of 512 (big streaming tiles); small tensors to 8
    return _round_up(m, 512) if m >= 512 else _round_up(m, 8)


def _pick_tile(dim, candidates):
    for c in candidates:
        if dim % c == 0:
            return c
    return dim


# ----------------------------------------------------------------------------
# Fused GEMM + BatchNorm-statistics kernel (conv path, no bias)
#   out  (Mp, Np)    bf16 conv result
#   stat (n_i, 2, Np) f32: per row-tile [column-sum ; column-sum-of-squares]
# ----------------------------------------------------------------------------
def _gemm_bn_kernel(a_ref, b_ref, o_ref, stat_ref, acc_ref):
    @pl.when(pl.program_id(2) == 0)
    def _():
        acc_ref[...] = jnp.zeros_like(acc_ref)

    acc_ref[...] += jnp.dot(a_ref[...], b_ref[...],
                            preferred_element_type=jnp.float32)

    @pl.when(pl.program_id(2) == pl.num_programs(2) - 1)
    def _():
        y = acc_ref[...]
        o_ref[...] = y.astype(o_ref.dtype)
        tn = y.shape[1]
        s0 = jnp.sum(y, axis=0, keepdims=True)          # (1, TN)
        s1 = jnp.sum(y * y, axis=0, keepdims=True)      # (1, TN)
        row = jax.lax.broadcasted_iota(jnp.int32, (2, tn), 0)
        stat = jnp.where(row == 0,
                         jnp.broadcast_to(s0, (2, tn)),
                         jnp.broadcast_to(s1, (2, tn)))
        stat_ref[...] = stat.reshape(1, 2, tn)


def gemm_bn(a_bf16, b_bf16):
    """a:(Mp,Kp) bf16 @ b:(Kp,Np) bf16 -> (bf16 (Mp,Np), sum (Np,), sumsq (Np,))."""
    Mp, Kp = a_bf16.shape
    _, Np = b_bf16.shape
    tm = _pick_tile(Mp, (512, 256, 128))
    tn = _pick_tile(Np, (256, 128))
    tk = _pick_tile(Kp, (512, 384, 256, 128))
    n_i = Mp // tm
    out, stats = pl.pallas_call(
        _gemm_bn_kernel,
        out_shape=(jax.ShapeDtypeStruct((Mp, Np), jnp.bfloat16),
                   jax.ShapeDtypeStruct((n_i, 2, Np), jnp.float32)),
        grid_spec=pltpu.PrefetchScalarGridSpec(
            num_scalar_prefetch=0,
            grid=(n_i, Np // tn, Kp // tk),
            in_specs=[
                pl.BlockSpec((tm, tk), lambda i, j, k: (i, k)),
                pl.BlockSpec((tk, tn), lambda i, j, k: (k, j)),
            ],
            out_specs=(pl.BlockSpec((tm, tn), lambda i, j, k: (i, j)),
                       pl.BlockSpec((1, 2, tn), lambda i, j, k: (i, 0, j))),
            scratch_shapes=[pltpu.VMEM((tm, tn), jnp.float32)],
        ),
        compiler_params=pltpu.CompilerParams(
            dimension_semantics=("parallel", "parallel", "arbitrary")),
    )(a_bf16, b_bf16)
    ssum = jnp.sum(stats[:, 0, :], axis=0)
    ssq = jnp.sum(stats[:, 1, :], axis=0)
    return out, ssum, ssq


# ----------------------------------------------------------------------------
# GEMM + bias kernel (final Linear layer), f32 output
# ----------------------------------------------------------------------------
def _gemm_bias_kernel(a_ref, b_ref, bias_ref, o_ref, acc_ref):
    @pl.when(pl.program_id(2) == 0)
    def _():
        acc_ref[...] = jnp.zeros_like(acc_ref)

    acc_ref[...] += jnp.dot(a_ref[...], b_ref[...],
                            preferred_element_type=jnp.float32)

    @pl.when(pl.program_id(2) == pl.num_programs(2) - 1)
    def _():
        o_ref[...] = acc_ref[...] + bias_ref[...]


def matmul_bias(a, b, bias):
    M, K = a.shape
    _, Nc = b.shape
    Mp, Kp, Np = _row_pad(M), _round_up(K, 128), _round_up(Nc, 128)
    tm = _pick_tile(Mp, (512, 256, 128))
    tn = _pick_tile(Np, (256, 128))
    tk = _pick_tile(Kp, (512, 384, 256, 128))
    ap = jnp.pad(a.astype(jnp.bfloat16), ((0, Mp - M), (0, Kp - K)))
    bp = jnp.pad(b.astype(jnp.bfloat16), ((0, Kp - K), (0, Np - Nc)))
    biasp = jnp.pad(bias.astype(jnp.float32), (0, Np - Nc)).reshape(1, Np)
    out = pl.pallas_call(
        _gemm_bias_kernel,
        out_shape=jax.ShapeDtypeStruct((Mp, Np), jnp.float32),
        grid_spec=pltpu.PrefetchScalarGridSpec(
            num_scalar_prefetch=0,
            grid=(Mp // tm, Np // tn, Kp // tk),
            in_specs=[
                pl.BlockSpec((tm, tk), lambda i, j, k: (i, k)),
                pl.BlockSpec((tk, tn), lambda i, j, k: (k, j)),
                pl.BlockSpec((1, tn), lambda i, j, k: (0, j)),
            ],
            out_specs=pl.BlockSpec((tm, tn), lambda i, j, k: (i, j)),
            scratch_shapes=[pltpu.VMEM((tm, tn), jnp.float32)],
        ),
        compiler_params=pltpu.CompilerParams(
            dimension_semantics=("parallel", "parallel", "arbitrary")),
    )(ap, bp, biasp)
    return out[:M, :Nc]


# ----------------------------------------------------------------------------
# Fused BN-apply (+ residual) (+ ReLU) elementwise kernel (f32 math, bf16 io).
# Pad rows (row >= m_true) are forced back to zero so the padded slab can be
# consumed directly by the next GEMM / stats without re-slicing.
# ----------------------------------------------------------------------------
@functools.lru_cache(maxsize=None)
def _make_bn_apply_kernel(relu, has_res, m_true, tmr):
    need_mask = m_true is not None

    def _finish(y, o_ref):
        if relu:
            y = jnp.maximum(y, 0.0)
        if need_mask:
            rows = pl.program_id(0) * tmr + jax.lax.broadcasted_iota(
                jnp.int32, (tmr, 1), 0)
            y = jnp.where(rows < m_true, y, 0.0)
        o_ref[...] = y.astype(o_ref.dtype)

    if has_res:
        def kernel(x_ref, scale_ref, bias_ref, res_ref, o_ref):
            y = x_ref[...].astype(jnp.float32) * scale_ref[...] + bias_ref[...]
            y = y + res_ref[...].astype(jnp.float32)
            _finish(y, o_ref)
    else:
        def kernel(x_ref, scale_ref, bias_ref, o_ref):
            y = x_ref[...].astype(jnp.float32) * scale_ref[...] + bias_ref[...]
            _finish(y, o_ref)
    return kernel


def bn_apply(y_slab, scale, bias, m_true, res_slab=None, relu=True):
    Mp, Cp = y_slab.shape
    tmr = _pick_tile(Mp, (1024, 512, 256, 128))
    need_mask = Mp != m_true
    kernel = _make_bn_apply_kernel(relu, res_slab is not None,
                                   m_true if need_mask else None, tmr)
    scale2 = scale.reshape(1, Cp).astype(jnp.float32)
    bias2 = bias.reshape(1, Cp).astype(jnp.float32)
    in_specs = [pl.BlockSpec((tmr, Cp), lambda i: (i, 0)),
                pl.BlockSpec((1, Cp), lambda i: (0, 0)),
                pl.BlockSpec((1, Cp), lambda i: (0, 0))]
    args = [y_slab, scale2, bias2]
    if res_slab is not None:
        in_specs.append(pl.BlockSpec((tmr, Cp), lambda i: (i, 0)))
        args.append(res_slab)
    return pl.pallas_call(
        kernel,
        out_shape=jax.ShapeDtypeStruct((Mp, Cp), jnp.bfloat16),
        grid_spec=pltpu.PrefetchScalarGridSpec(
            num_scalar_prefetch=0,
            grid=(Mp // tmr,),
            in_specs=in_specs,
            out_specs=pl.BlockSpec((tmr, Cp), lambda i: (i, 0)),
        ),
        compiler_params=pltpu.CompilerParams(
            dimension_semantics=("parallel",)),
    )(*args)


# ----------------------------------------------------------------------------
# Pooling kernel: reduce (max or mean) over the stacked shifted-window axis.
# ----------------------------------------------------------------------------
@functools.lru_cache(maxsize=None)
def _make_pool_kernel(op, kwin):
    def kernel(x_ref, o_ref):
        acc = x_ref[0].astype(jnp.float32)
        for k in range(1, kwin):
            v = x_ref[k].astype(jnp.float32)
            acc = jnp.maximum(acc, v) if op == "max" else acc + v
        if op == "avg":
            acc = acc * (1.0 / kwin)
        o_ref[...] = acc.astype(o_ref.dtype)
    return kernel


def pool_reduce(stacked, op):
    Kw, Mp, Cp = stacked.shape
    tmr = _pick_tile(Mp, (1024, 512, 256, 128))
    return pl.pallas_call(
        _make_pool_kernel(op, Kw),
        out_shape=jax.ShapeDtypeStruct((Mp, Cp), jnp.bfloat16),
        grid_spec=pltpu.PrefetchScalarGridSpec(
            num_scalar_prefetch=0,
            grid=(Mp // tmr,),
            in_specs=[pl.BlockSpec((Kw, tmr, Cp), lambda i: (0, i, 0))],
            out_specs=pl.BlockSpec((tmr, Cp), lambda i: (i, 0)),
        ),
        compiler_params=pltpu.CompilerParams(
            dimension_semantics=("parallel",)),
    )(stacked)


# ----------------------------------------------------------------------------
# Plain-JAX glue.  Activations travel as Act = (slab bf16 (Mp,Cp), N, H, W, C)
# with pad rows / pad channels guaranteed zero.
# ----------------------------------------------------------------------------
def _bn_scale_bias(ssum, ssq, m_true, gamma, beta, cout, cp):
    mean = ssum / m_true
    var = jnp.maximum(ssq / m_true - mean * mean, 0.0)   # clamp cancellation
    g = jnp.pad(gamma.astype(jnp.float32), (0, cp - cout))
    b = jnp.pad(beta.astype(jnp.float32), (0, cp - cout))
    scale = g * jax.lax.rsqrt(var + BN_EPS)
    bias = b - mean * scale
    return scale, bias


def im2col(x, kh, kw, stride, pad):
    """x: (N,H,W,C) -> patches (N*Ho*Wo, kh*kw*C), plus (N, Ho, Wo)."""
    N, H, W, C = x.shape
    if pad > 0:
        x = jnp.pad(x, ((0, 0), (pad, pad), (pad, pad), (0, 0)))
    Ho = (H + 2 * pad - kh) // stride + 1
    Wo = (W + 2 * pad - kw) // stride + 1
    cols = []
    for i in range(kh):
        for j in range(kw):
            cols.append(x[:, i:i + (Ho - 1) * stride + 1:stride,
                          j:j + (Wo - 1) * stride + 1:stride, :])
    patches = jnp.concatenate(cols, axis=-1)
    return patches.reshape(N * Ho * Wo, kh * kw * C), (N, Ho, Wo)


def conv1x1_bn(act, w, gamma, beta, stride=1, relu=True, residual=None):
    """1x1 Conv2d (bias=False) + BatchNorm2d (batch stats) + optional residual
       + optional ReLU.  Stride-1 case is a direct GEMM on the slab."""
    slab, N, H, W, C = act
    cp_in = slab.shape[1]
    cout = w.shape[1]
    cp_out = _round_up(cout, 128)
    if stride == 1:
        a = slab
        Ho, Wo = H, W
        M_out = N * Ho * Wo
        Mp = slab.shape[0]
    else:
        x4 = slab[:N * H * W].reshape(N, H, W, cp_in)
        x4 = x4[:, ::stride, ::stride, :]
        Ho, Wo = x4.shape[1], x4.shape[2]
        M_out = N * Ho * Wo
        Mp = _row_pad(M_out)
        a = jnp.pad(x4.reshape(M_out, cp_in), ((0, Mp - M_out), (0, 0)))
    wp = jnp.pad(w.astype(jnp.bfloat16),
                 ((0, cp_in - w.shape[0]), (0, cp_out - cout)))
    y, ssum, ssq = gemm_bn(a, wp)
    scale, bias = _bn_scale_bias(ssum, ssq, M_out, gamma, beta, cout, cp_out)
    res_slab = residual[0] if residual is not None else None
    out = bn_apply(y, scale, bias, M_out, res_slab=res_slab, relu=relu)
    return (out, N, Ho, Wo, cout)


def conv_im2col_bn(act_or_x4, w, gamma, beta, kh, kw, stride, pad, relu=True):
    """kxk Conv2d (bias=False) + BatchNorm2d + optional ReLU via im2col GEMM."""
    if isinstance(act_or_x4, tuple):
        slab, N, H, W, C = act_or_x4
        x4 = slab[:N * H * W, :C].reshape(N, H, W, C)
    else:
        x4 = act_or_x4.astype(jnp.bfloat16)
        N, H, W, C = x4.shape
    cout = w.shape[1]
    cp_out = _round_up(cout, 128)
    patches, (N, Ho, Wo) = im2col(x4, kh, kw, stride, pad)
    M_out = N * Ho * Wo
    K = patches.shape[1]
    Mp, Kp = _row_pad(M_out), _round_up(K, 128)
    a = jnp.pad(patches.astype(jnp.bfloat16), ((0, Mp - M_out), (0, Kp - K)))
    wp = jnp.pad(w.astype(jnp.bfloat16), ((0, Kp - K), (0, cp_out - cout)))
    y, ssum, ssq = gemm_bn(a, wp)
    scale, bias = _bn_scale_bias(ssum, ssq, M_out, gamma, beta, cout, cp_out)
    out = bn_apply(y, scale, bias, M_out, relu=relu)
    return (out, N, Ho, Wo, cout)


def window_pool(act, k, stride, op):
    """k x k pooling (no padding) via stacked shifted views + Pallas reduce."""
    slab, N, H, W, C = act
    Cp = slab.shape[1]
    x4 = slab[:N * H * W].reshape(N, H, W, Cp)
    Ho = (H - k) // stride + 1
    Wo = (W - k) // stride + 1
    M2 = N * Ho * Wo
    views = []
    for i in range(k):
        for j in range(k):
            views.append(
                x4[:, i:i + (Ho - 1) * stride + 1:stride,
                   j:j + (Wo - 1) * stride + 1:stride, :].reshape(M2, Cp))
    stacked = jnp.stack(views, axis=0)                      # (k*k, M2, Cp)
    Mp2 = _row_pad(M2)
    stacked = jnp.pad(stacked, ((0, 0), (0, Mp2 - M2), (0, 0)))
    out = pool_reduce(stacked, op)
    return (out, N, Ho, Wo, C)


# ----------------------------------------------------------------------------
# Model parameters and forward pass (mirrors the PyTorch ResNet50 module)
# ----------------------------------------------------------------------------
class KeyGen:
    def __init__(self, key):
        self.key = key

    def __call__(self):
        self.key, sub = jax.random.split(self.key)
        return sub


def _conv_weight(kg, kh, kw, cin, cout):
    fan_in = kh * kw * cin
    return jax.random.normal(kg(), (kh * kw * cin, cout), jnp.float32) * (2.0 / fan_in) ** 0.5


def _bn_params(c):
    # PyTorch BatchNorm2d default init: weight=1, bias=0
    return jnp.ones((c,), jnp.float32), jnp.zeros((c,), jnp.float32)


def make_bottleneck_params(kg, in_ch, mid_ch, out_ch, halve, starting):
    if starting:
        halve = False
    stride = 2 if halve else 1
    g1, b1 = _bn_params(mid_ch)
    g2, b2 = _bn_params(mid_ch)
    g3, b3 = _bn_params(out_ch)
    gs, bs = _bn_params(out_ch)
    return dict(
        stride=stride,
        w1=_conv_weight(kg, 1, 1, in_ch, mid_ch), g1=g1, b1=b1,
        w2=_conv_weight(kg, 3, 3, mid_ch, mid_ch), g2=g2, b2=b2,
        w3=_conv_weight(kg, 1, 1, mid_ch, out_ch), g3=g3, b3=b3,
        w_sc=_conv_weight(kg, 1, 1, in_ch, out_ch), g_sc=gs, b_sc=bs,
    )


def make_params(key, base_dim, repeats=(3, 4, 6, 3), num_classes=1000):
    kg = KeyGen(key)
    params = {}
    g, b = _bn_params(base_dim)
    params["stem"] = dict(w=_conv_weight(kg, 7, 7, 3, base_dim), g=g, b=b)

    stage_cfg = [
        (base_dim,       base_dim,      base_dim * 4,  repeats[0], True),
        (base_dim * 4,   base_dim * 2,  base_dim * 8,  repeats[1], False),
        (base_dim * 8,   base_dim * 4,  base_dim * 16, repeats[2], False),
        (base_dim * 16,  base_dim * 8,  base_dim * 32, repeats[3], False),
    ]
    stages = []
    for in_ch, mid_ch, out_ch, reps, starting in stage_cfg:
        blocks = [make_bottleneck_params(kg, in_ch, mid_ch, out_ch,
                                         halve=True, starting=starting)]
        for _ in range(1, reps):
            blocks.append(make_bottleneck_params(kg, out_ch, mid_ch, out_ch,
                                                 halve=False, starting=False))
        stages.append(blocks)
    params["stages"] = stages

    params["fc_w"] = jax.random.normal(kg(), (2048, num_classes), jnp.float32) * (1.0 / 2048.0) ** 0.5
    params["fc_b"] = jnp.zeros((num_classes,), jnp.float32)
    return params


def bottleneck_forward(act, p):
    # skip connection: 1x1 conv (stride matches the block) + BN, no ReLU
    identity = conv1x1_bn(act, p["w_sc"], p["g_sc"], p["b_sc"],
                          stride=p["stride"], relu=False)
    # bottleneck path: 1x1 -> BN/ReLU -> 3x3 -> BN/ReLU -> 1x1 -> BN(+res)+ReLU
    h = conv1x1_bn(act, p["w1"], p["g1"], p["b1"],
                   stride=p["stride"], relu=True)
    h = conv_im2col_bn(h, p["w2"], p["g2"], p["b2"], 3, 3, 1, 1, relu=True)
    out = conv1x1_bn(h, p["w3"], p["g3"], p["b3"], stride=1, relu=True,
                     residual=identity)
    return out


def resnet50_forward(params, x_nchw):
    x = jnp.transpose(x_nchw.astype(jnp.float32), (0, 2, 3, 1))   # NCHW -> NHWC

    # stem: 7x7 s2 p4 conv + BN + ReLU + 3x3 s2 maxpool (padding per module)
    st = params["stem"]
    act = conv_im2col_bn(x, st["w"], st["g"], st["b"], 7, 7, 2, 4, relu=True)
    act = window_pool(act, 3, 2, "max")

    # conv2..conv5 bottleneck stages
    for stage in params["stages"]:
        for blk in stage:
            act = bottleneck_forward(act, blk)

    # AvgPool2d(kernel=7, stride=1)
    act = window_pool(act, 7, 1, "avg")

    # Flatten in the same (C, H, W) order PyTorch uses, then FC
    slab, N, Ho, Wo, C = act
    feat4 = slab[:N * Ho * Wo, :C].reshape(N, Ho, Wo, C)
    feat = jnp.transpose(feat4, (0, 3, 1, 2)).reshape(N, C * Ho * Wo)
    return matmul_bias(feat, params["fc_w"], params["fc_b"])


if __name__ == "__main__":
    # Small configuration consistent with the module: base_dim=16 and a
    # 256x256 input give a 2048-dim flattened feature, matching the hardcoded
    # nn.Linear(in_features=2048, ...).
    base_dim = 16
    num_classes = 1000
    batch = 2

    kg = KeyGen(jax.random.PRNGKey(0))
    params = make_params(kg(), base_dim=base_dim, repeats=(3, 4, 6, 3),
                         num_classes=num_classes)
    x = jax.random.normal(kg(), (batch, 3, 256, 256), jnp.float32)

    logits = resnet50_forward(params, x)
    logits = jax.block_until_ready(logits)

    assert logits.shape == (batch, num_classes), logits.shape
    assert bool(jnp.all(jnp.isfinite(logits)))
    print("KERNEL_OK")
</pallas_src>

<mosaic_0001>
module attributes {stable_mosaic.version = 11 : i64} {
  func.func @_gemm_bn_kernel(%arg0: i32, %arg1: i32, %arg2: i32, %arg3: memref<512x256xbf16, #tpu.memory_space<vmem>>, %arg4: memref<256x128xbf16, #tpu.memory_space<vmem>>, %arg5: memref<512x128xbf16, #tpu.memory_space<vmem>>, %arg6: memref<1x2x128xf32, #tpu.memory_space<vmem>>, %arg7: memref<512x128xf32, #tpu.memory_space<vmem>>) attributes {dimension_semantics = [#tpu.dimension_semantics<parallel>, #tpu.dimension_semantics<parallel>, #tpu.dimension_semantics<arbitrary>], iteration_bounds = array<i64: 66, 1, 1>, scalar_prefetch = 0 : i64, scratch_operands = 1 : i64, tpu.core_type = #tpu.core_type<tc>, window_params = [{transform_indices = @transform_0, window_bounds = array<i64: 512, 256>}, {transform_indices = @transform_1, window_bounds = array<i64: 256, 128>}, {transform_indices = @transform_2, window_bounds = array<i64: 512, 128>}, {transform_indices = @transform_3, window_bounds = array<i64: 1, 2, 128>}]} {
    %c0_i32 = arith.constant 0 : i32
    %0 = arith.cmpi eq, %arg2, %c0_i32 : i32
    %1 = arith.extui %0 : i1 to i32
    %c0_i32_0 = arith.constant 0 : i32
    %2 = arith.cmpi ne, %1, %c0_i32_0 : i32
    scf.if %2 {
      %cst_10 = arith.constant 0.000000e+00 : f32
      %12 = vector.broadcast %cst_10 : f32 to vector<512x128xf32>
      %c0_11 = arith.constant 0 : index
      %c0_12 = arith.constant 0 : index
      %13 = vector.load %arg7[%c0_11, %c0_12] : memref<512x128xf32, #tpu.memory_space<vmem>>, vector<512x128xf32>
      tpu.vector_store %arg7[%c0_11, %c0_12], %12 {strides = array<i32>} : memref<512x128xf32, #tpu.memory_space<vmem>>, vector<512x128xf32>,
    } else {
    }
    %c0 = arith.constant 0 : index
    %c0_1 = arith.constant 0 : index
    %3 = vector.load %arg7[%c0, %c0_1] : memref<512x128xf32, #tpu.memory_space<vmem>>, vector<512x128xf32>
    %c0_2 = arith.constant 0 : index
    %c0_3 = arith.constant 0 : index
    %4 = vector.load %arg3[%c0_2, %c0_3] : memref<512x256xbf16, #tpu.memory_space<vmem>>, vector<512x256xbf16>
    %c0_4 = arith.constant 0 : index
    %c0_5 = arith.constant 0 : index
    %5 = vector.load %arg4[%c0_4, %c0_5] : memref<256x128xbf16, #tpu.memory_space<vmem>>, vector<256x128xbf16>
    %cst = arith.constant dense<0.000000e+00> : vector<512x128xf32>
    %6 = tpu.matmul %4, %5, %cst {dimension_numbers = #tpu.dot_dimension_numbers<[1], [0], [0], [1], [0, 0, 1, 1], [], []>} : vector<512x256xbf16>, vector<256x128xbf16>, vector<512x128xf32> -> vector<512x128xf32>
    %7 = arith.addf %3, %6 : vector<512x128xf32>
    %c0_6 = arith.constant 0 : index
    %c0_7 = arith.constant 0 : index
    %8 = vector.load %arg7[%c0_6, %c0_7] : memref<512x128xf32, #tpu.memory_space<vmem>>, vector<512x128xf32>
    tpu.vector_store %arg7[%c0_6, %c0_7], %7 {strides = array<i32>} : memref<512x128xf32, #tpu.memory_space<vmem>>, vector<512x128xf32>,
    %c0_i32_8 = arith.constant 0 : i32
    %9 = arith.cmpi eq, %arg2, %c0_i32_8 : i32
    %10 = arith.extui %9 : i1 to i32
    %c0_i32_9 = arith.constant 0 : i32
    %11 = arith.cmpi ne, %10, %c0_i32_9 : i32
    scf.if %11 {
      %c0_10 = arith.constant 0 : index
      %c0_11 = arith.constant 0 : index
      %12 = vector.load %arg7[%c0_10, %c0_11] : memref<512x128xf32, #tpu.memory_space<vmem>>, vector<512x128xf32>
      %13 = arith.truncf %12 : vector<512x128xf32> to vector<512x128xbf16>
      %c0_12 = arith.constant 0 : index
      %c0_13 = arith.constant 0 : index
      %14 = vector.load %arg5[%c0_12, %c0_13] : memref<512x128xbf16, #tpu.memory_space<vmem>>, vector<512x128xbf16>
      tpu.vector_store %arg5[%c0_12, %c0_13], %13 {strides = array<i32>} : memref<512x128xbf16, #tpu.memory_space<vmem>>, vector<512x128xbf16>,
      %cst_14 = arith.constant dense<0.000000e+00> : vector<128xf32>
      %15 = vector.multi_reduction <add>, %12, %cst_14 [0] : vector<512x128xf32> to vector<128xf32>
      %16 = vector.shape_cast %15 : vector<128xf32> to vector<1x128xf32>
      %17 = arith.mulf %12, %12 : vector<512x128xf32>
      %cst_15 = arith.constant dense<0.000000e+00> : vector<128xf32>
      %18 = vector.multi_reduction <add>, %17, %cst_15 [0] : vector<512x128xf32> to vector<128xf32>
      %19 = vector.shape_cast %18 : vector<128xf32> to vector<1x128xf32>
      %20 = tpu.iota {dimensions = array<i32: 0>} : vector<2x128xi32>
      %c0_i32_16 = arith.constant 0 : i32
      %21 = vector.broadcast %c0_i32_16 : i32 to vector<2x128xi32>
      %22 = arith.cmpi eq, %20, %21 : vector<2x128xi32>
      %23 = vector.shape_cast %16 : vector<1x128xf32> to vector<1x128xf32>
      %24 = vector.broadcast %23 : vector<1x128xf32> to vector<2x128xf32>
      %25 = vector.shape_cast %19 : vector<1x128xf32> to vector<1x128xf32>
      %26 = vector.broadcast %25 : vector<1x128xf32> to vector<2x128xf32>
      %27 = arith.select %22, %24, %26 : vector<2x128xi1>, vector<2x128xf32>
      %28 = vector.shape_cast %27 : vector<2x128xf32> to vector<1x2x128xf32>
      %c0_17 = arith.constant 0 : index
      %c0_18 = arith.constant 0 : index
      %c0_19 = arith.constant 0 : index
      %29 = vector.load %arg6[%c0_17, %c0_18, %c0_19] : memref<1x2x128xf32, #tpu.memory_space<vmem>>, vector<1x2x128xf32>
      tpu.vector_store %arg6[%c0_17, %c0_18, %c0_19], %28 {strides = array<i32>} : memref<1x2x128xf32, #tpu.memory_space<vmem>>, vector<1x2x128xf32>,
    } else {
    }
    return
  }
  func.func @transform_0(%arg0: i32, %arg1: i32, %arg2: i32) -> (i32, i32) {
    %c0_i32 = arith.constant 0 : i32
    return %arg0, %arg2 : i32, i32
  }
  func.func @transform_1(%arg0: i32, %arg1: i32, %arg2: i32) -> (i32, i32) {
    %c0_i32 = arith.constant 0 : i32
    return %arg2, %arg1 : i32, i32
  }
  func.func @transform_2(%arg0: i32, %arg1: i32, %arg2: i32) -> (i32, i32) {
    %c0_i32 = arith.constant 0 : i32
    return %arg0, %arg1 : i32, i32
  }
  func.func @transform_3(%arg0: i32, %arg1: i32, %arg2: i32) -> (i32, i32, i32) {
    %c0_i32 = arith.constant 0 : i32
    %c0_i32_0 = arith.constant 0 : i32
    return %arg0, %c0_i32, %arg1 : i32, i32, i32
  }
}

</mosaic_0001>

<llo_original>
// kernel: tpu_custom_call.1
$region0: #{tpu_custom_call.1}
  #allocation0 [shape = 'u32[]', space=smem, size = 0x4, offset = 0x4, fixed_abs, tag = 'smem constant byte address 0x4 - core index']
  #allocation1 [shape = 'u32[144,128]{1,0:T(1,128)}', space=vmem, size = 0x12000, scoped, tag = 'internal scratch']
  #allocation2 [shape = 'f32[512,128]{1,0:T(8,128)}', space=vmem, size = 0x40000, scoped, tag = 'scratch operand']
  %s0 = inlined_call_operand.hbm [shape: bf16[33792,256], index: 0, kind: input, shape index: {}]
  %s1 = inlined_call_operand.hbm [shape: bf16[256,128], index: 1, kind: input, shape index: {}]
  %s2 = inlined_call_operand.hbm [shape: bf16[33792,128], index: 2, kind: output, shape index: {0}]
  %s3 = inlined_call_operand.hbm [shape: f32[66,2,128], index: 3, kind: output, shape index: {1}]
  %4 = xla_tuple %s2, %s3
  %s5 = sld [smem:[#allocation0]]
  $region65: #{tpu_custom_call.1} parent=0
    _
  %s7 = ssub.s32 1, %s5
  %s8 = scalar_select 0, %s7, %s5
  $region1: #{tpu_custom_call.1} parent=0
    #allocation3 [shape = 'u8[524288]{0}', space=vmem, size = 0x80000, scoped, tag = 'input window, operand 0']
    #allocation4 [shape = 's32[2]{0}', space=sflag, size = 0x8, scoped, tag = 'scoped memory for tpu_custom_call.1']
    #allocation5 [shape = 's32[2]{0}', space=sflag, size = 0x8, scoped, tag = 'scoped memory for tpu_custom_call.1']
    #allocation6 [shape = 'u8[65536]{0}', space=vmem, size = 0x10000, scoped, tag = 'input window, operand 1, single buffered']
    #allocation7 [shape = 's32[1]{0}', space=sflag, size = 0x4, scoped, tag = 'scoped memory for tpu_custom_call.1']
    #allocation8 [shape = 'u8[262144]{0}', space=vmem, size = 0x40000, scoped, tag = 'output window, operand 0']
    #allocation9 [shape = 'u8[2048]{0}', space=vmem, size = 0x800, scoped, tag = 'output window, operand 1']
    #allocation10 [shape = 's32[2]{0}', space=sflag, size = 0x8, scoped, tag = 'scoped memory for tpu_custom_call.1']
    %9 = vsyncpa [#allocation4], 0
    %s10 = scalar_lea.sflag [#allocation4], 1
    %11 = vsyncpa %s10, 0
    %12 = vsyncpa [#allocation7], 0
    %13 = vsyncpa [#allocation5], 0
    %s14 = scalar_lea.sflag [#allocation5], 1
    %15 = vsyncpa %s14, 0
    %16 = vsyncpa [#allocation10], 0
    %s17 = scalar_lea.sflag [#allocation10], 1
    %18 = vsyncpa %s17, 0
    loop: start=0, step=1, limit=68
    $region2: #{tpu_custom_call.1} parent=1 // loop_pre_header
      _
    $region3: #{tpu_custom_call.1} parent=1 // loop_header
      %s20 = sphi 0, %s24
      %p21 = scmp.ge.s32.totalorder %s20, 68
      %s27 = sphi 0, %s46
      %s28 = sphi 0, %s42
      %s29 = sphi 0, %s38
      %s30 = sphi 0, %s27
      %s31 = sphi 0, %s28
      %s32 = sphi 0, %s29
      %s33 = sphi 0, %s30
      %s34 = sphi 0, %s31
      %s35 = sphi 0, %s32
      %s51 = sphi 0, %s53
      %s54 = sphi 0, %s51
      %s55 = sphi 0, %s54
      %s71 = sphi 0, %s55
      %s79 = sphi 0, %s81
      %s82 = sphi 0, %s79
      %s83 = sphi 0, %s82
      %s99 = sphi 0, %s83
      %s107 = sphi 0, %s109
      %s110 = sphi 0, %s107
      %s111 = sphi 0, %s110
      %s127 = sphi 0, %s111
      %s135 = sphi 0, %s137
      %s138 = sphi 0, %s135
      %s139 = sphi 0, %s138
      %s155 = sphi 0, %s139
    $region4: #{tpu_custom_call.1} parent=1 // loop_header_branch
      %23 = sbr.rel (%p21) target = $region8
    $region5: #{tpu_custom_call.1} parent=1 // loop_body
      %s25 = ssub.s32 %s20, 1
      %s26 = ssub.s32 %s20, 2
      %s36 = sadd.s32 1, %s29
      %p37 = scmp.ge.s32.totalorder %s36, 1
      %s38 = scalar_select %p37, 0, %s36
      %s39 = sadd.s32 1, %s28
      %s40 = scalar_select %p37, %s39, %s28
      %p41 = scmp.ge.s32.totalorder %s40, 1
      %s42 = scalar_select %p41, 0, %s40
      %s43 = sadd.s32 1, %s27
      %s44 = scalar_select %p41, %s43, %s27
      %p45 = scmp.ge.s32.totalorder %s44, 66
      %s46 = scalar_select %p45, 0, %s44
      %s47 = ssub.s32 %s27, %s46
      %s48 = ssub.s32 %s29, %s38
      %s49 = sor.u32 %s47, %s48
      %p50 = scmp.eq.s32.totalorder %s49, 0
      %s52 = sadd.s32 %s51, 1
      %s53 = scalar_select %p50, %s51, %s52
      %p56 = pneg %p50
      %p57 = scmp.eq.s32.totalorder %s20, 65
      %p58 = por %p56, %p57
      %p59 = scmp.ne.s32.totalorder %s51, %s54
      %p60 = scmp.eq.s32.totalorder %s20, 0
      %p61 = por %p59, %p60
      %p62 = scmp.ne.s32.totalorder %s51, %s54
      %p63 = scmp.eq.s32.totalorder %s25, 65
      %p64 = por %p62, %p63
      %p65 = scmp.ne.s32.totalorder %s54, %s55
      %p66 = scmp.eq.s32.totalorder %s25, 0
      %p67 = por %p65, %p66
      %p68 = scmp.ne.s32.totalorder %s54, %s55
      %p69 = scmp.eq.s32.totalorder %s26, 65
      %p70 = por %p68, %p69
      %p72 = scmp.ne.s32.totalorder %s55, %s71
      %p73 = scmp.eq.s32.totalorder %s26, 0
      %p74 = por %p72, %p73
      %s75 = ssub.s32 %s29, %s38
      %s76 = ssub.s32 %s28, %s42
      %s77 = sor.u32 %s75, %s76
      %p78 = scmp.eq.s32.totalorder %s77, 0
      %s80 = sadd.s32 %s79, 1
      %s81 = scalar_select %p78, %s79, %s80
      %p84 = pneg %p78
      %p85 = scmp.eq.s32.totalorder %s20, 65
      %p86 = por %p84, %p85
      %p87 = scmp.ne.s32.totalorder %s79, %s82
      %p88 = scmp.eq.s32.totalorder %s20, 0
      %p89 = por %p87, %p88
      %p90 = scmp.ne.s32.totalorder %s79, %s82
      %p91 = scmp.eq.s32.totalorder %s25, 65
      %p92 = por %p90, %p91
      %p93 = scmp.ne.s32.totalorder %s82, %s83
      %p94 = scmp.eq.s32.totalorder %s25, 0
      %p95 = por %p93, %p94
      %p96 = scmp.ne.s32.totalorder %s82, %s83
      %p97 = scmp.eq.s32.totalorder %s26, 65
      %p98 = por %p96, %p97
      %p100 = scmp.ne.s32.totalorder %s83, %s99
      %p101 = scmp.eq.s32.totalorder %s26, 0
      %p102 = por %p100, %p101
      %s103 = ssub.s32 %s27, %s46
      %s104 = ssub.s32 %s28, %s42
      %s105 = sor.u32 %s103, %s104
      %p106 = scmp.eq.s32.totalorder %s105, 0
      %s108 = sadd.s32 %s107, 1
      %s109 = scalar_select %p106, %s107, %s108
      %p112 = pneg %p106
      %p113 = scmp.eq.s32.totalorder %s20, 65
      %p114 = por %p112, %p113
      %p115 = scmp.ne.s32.totalorder %s107, %s110
      %p116 = scmp.eq.s32.totalorder %s20, 0
      %p117 = por %p115, %p116
      %p118 = scmp.ne.s32.totalorder %s107, %s110
      %p119 = scmp.eq.s32.totalorder %s25, 65
      %p120 = por %p118, %p119
      %p121 = scmp.ne.s32.totalorder %s110, %s111
      %p122 = scmp.eq.s32.totalorder %s25, 0
      %p123 = por %p121, %p122
      %p124 = scmp.ne.s32.totalorder %s110, %s111
      %p125 = scmp.eq.s32.totalorder %s26, 65
      %p126 = por %p124, %p125
      %p128 = scmp.ne.s32.totalorder %s111, %s127
      %p129 = scmp.eq.s32.totalorder %s26, 0
      %p130 = por %p128, %p129
      %s131 = ssub.s32 %s27, %s46
      %s132 = ssub.s32 %s28, %s42
      %s133 = sor.u32 %s131, %s132
      %p134 = scmp.eq.s32.totalorder %s133, 0
      %s136 = sadd.s32 %s135, 1
      %s137 = scalar_select %p134, %s135, %s136
      %p140 = pneg %p134
      %p141 = scmp.eq.s32.totalorder %s20, 65
      %p142 = por %p140, %p141
      %p143 = scmp.ne.s32.totalorder %s135, %s138
      %p144 = scmp.eq.s32.totalorder %s20, 0
      %p145 = por %p143, %p144
      %p146 = scmp.ne.s32.totalorder %s135, %s138
      %p147 = scmp.eq.s32.totalorder %s25, 65
      %p148 = por %p146, %p147
      %p149 = scmp.ne.s32.totalorder %s138, %s139
      %p150 = scmp.eq.s32.totalorder %s25, 0
      %p151 = por %p149, %p150
      %p152 = scmp.ne.s32.totalorder %s138, %s139
      %p153 = scmp.eq.s32.totalorder %s26, 65
      %p154 = por %p152, %p153
      %p156 = scmp.ne.s32.totalorder %s139, %s155
      %p157 = scmp.eq.s32.totalorder %s26, 0
      %p158 = por %p156, %p157
      %p159 = scmp.le.s32.totalorder 1, %s20
      %p160 = scmp.lt.s32.totalorder %s20, 67
      %p161 = pnand %p159, %p160
      %p162 = pneg %p161
      // Predicated region
      $region9: #{tpu_custom_call.1} parent=5 // pred_check
        _
      $region10: #{tpu_custom_call.1} parent=5 // pred_check_branch
        %164 = sbr.rel (%p161) target = $region12
      $region11: #{tpu_custom_call.1} parent=5 // pred_region
        %s165 = ssub.s32 %s20, 1
        // Predicated region
        $region13: #{tpu_custom_call.1} parent=11 // pred_check
          %p166 = pneg %p95
        $region14: #{tpu_custom_call.1} parent=11 // pred_check_branch
          %168 = sbr.rel (%p166) target = $region16
        $region15: #{tpu_custom_call.1} parent=11 // pred_region
          %s169 = smul.u32 32, %s32
          %s171 = ssub.s32 2048, 2048
          %172 = vsyncadd [#allocation7], %s171
          %s173 = sadd.s32 %s31, %s169
          %s174 = smul.addr %s173, 64
          %s175 = scalar_lea.hbm %s1, %s174
          %s176 = sshll.u32 [#allocation6], 4
          %s177 = int_to_ptr.vmem [resolvable:$true] %s176
          %182 = dma.hbm_to_vmem [thread:$0]  %s175, 2048, %s177, [#allocation7], 64, 64, 4
        $region16: #{tpu_custom_call.1} parent=11 // pred_fallthru
          _
      $region12: #{tpu_custom_call.1} parent=5 // pred_fallthru
        _
      %p183 = scmp.lt.s32.totalorder %s20, 66
      // Predicated region
      $region17: #{tpu_custom_call.1} parent=5 // pred_check
        %p184 = pneg %p183
      $region18: #{tpu_custom_call.1} parent=5 // pred_check_branch
        %186 = sbr.rel (%p184) target = $region20
      $region19: #{tpu_custom_call.1} parent=5 // pred_region
        // Predicated region
        $region21: #{tpu_custom_call.1} parent=19 // pred_check
          %p187 = pneg %p61
        $region22: #{tpu_custom_call.1} parent=19 // pred_check_branch
          %189 = sbr.rel (%p187) target = $region24
        $region23: #{tpu_custom_call.1} parent=19 // pred_region
          %s190 = sand.u32 %s51, 1
          %s191 = scalar_lea.sflag [#allocation4], %s190
          %s192 = sand.u32 %s51, 1
          %s193 = smul.addr %s192, 512
          %s194 = scalar_lea.vmem [#allocation3], %s193
          %s195 = smul.u32 64, %s27
          %s196 = smul.u32 2, %s29
          %s198 = ssub.s32 8192, 8192
          %199 = vsyncadd %s191, %s198
          %s200 = smul.addr %s195, 2
          %s201 = sadd.s32 %s196, %s200
          %s202 = smul.addr %s201, 64
          %s203 = scalar_lea.hbm %s0, %s202
          %s204 = sshll.u32 %s194, 4
          %s205 = int_to_ptr.vmem [resolvable:$true] %s204
          %210 = dma.hbm_to_vmem [thread:$0]  %s203, 8192, %s205, %s191, 128, 128, 8
        $region24: #{tpu_custom_call.1} parent=19 // pred_fallthru
          _
      $region20: #{tpu_custom_call.1} parent=5 // pred_fallthru
        _
      %p211 = scmp.le.s32.totalorder 1, %s20
      %p212 = scmp.lt.s32.totalorder %s20, 67
      %p213 = pnand %p211, %p212
      %p214 = pneg %p213
      // Predicated region
      $region25: #{tpu_custom_call.1} parent=5 // pred_check
        _
      $region26: #{tpu_custom_call.1} parent=5 // pred_check_branch
        %216 = sbr.rel (%p213) target = $region28
      $region27: #{tpu_custom_call.1} parent=5 // pred_region
        %s217 = ssub.s32 %s20, 1
        %s218 = sand.u32 %s54, 1
        %s219 = scalar_lea.sflag [#allocation4], %s218
        %s220 = sand.u32 %s54, 1
        %s221 = smul.addr %s220, 512
        %s222 = scalar_lea.vmem [#allocation3], %s221
        // Predicated region
        $region29: #{tpu_custom_call.1} parent=27 // pred_check
          %p223 = pneg %p67
        $region30: #{tpu_custom_call.1} parent=27 // pred_check_branch
          %225 = sbr.rel (%p223) target = $region32
        $region31: #{tpu_custom_call.1} parent=27 // pred_region
          %226 = dma.done %s219, 8192
        $region32: #{tpu_custom_call.1} parent=27 // pred_fallthru
          _
        // Predicated region
        $region33: #{tpu_custom_call.1} parent=27 // pred_check
          %p227 = pneg %p95
        $region34: #{tpu_custom_call.1} parent=27 // pred_check_branch
          %229 = sbr.rel (%p227) target = $region36
        $region35: #{tpu_custom_call.1} parent=27 // pred_region
          %230 = dma.done [#allocation7], 2048
        $region36: #{tpu_custom_call.1} parent=27 // pred_fallthru
          _
        %s231 = sand.u32 %s54, 1
        %s232 = scalar_lea.sflag [#allocation4], %s231
        %s233 = sand.u32 %s54, 1
        %s234 = smul.addr %s233, 512
        %s235 = scalar_lea.vmem [#allocation3], %s234
        %p236 = pneg %p67
        %p237 = pneg %p64
        %p238 = pneg %p95
        %p239 = pneg %p92
        %p240 = pneg %p123
        %p241 = pneg %p120
        %s242 = sand.u32 %s110, 1
        %s243 = scalar_lea.sflag [#allocation5], %s242
        %s244 = sand.u32 %s110, 1
        %s245 = smul.addr %s244, 256
        %s246 = scalar_lea.vmem [#allocation8], %s245
        %p247 = pneg %p151
        %p248 = pneg %p148
        %s249 = sand.u32 %s138, 1
        %s250 = scalar_lea.sflag [#allocation10], %s249
        %s251 = sand.u32 %s138, 1
        %s252 = smul.addr %s251, 2
        %s253 = scalar_lea.vmem [#allocation9], %s252
        %s254 = smul.u32 64, %s30
        %s255 = smul.u32 2, %s32
        %s256 = smul.u32 32, %s32
        %s257 = smul.u32 64, %s30
        %p259 = scmp.eq.s32.totalorder %s32, 0
        // Predicated region
        $region37: #{tpu_custom_call.1} parent=27 // pred_check
          %p260 = pneg %p259
        $region38: #{tpu_custom_call.1} parent=27 // pred_check_branch
          %262 = sbr.rel (%p260) target = $region40
        $region39: #{tpu_custom_call.1} parent=27 // pred_region
          %263 = vst [vmem:[#allocation2] sm:$0xff] 0.0
          %264 = vst [vmem:[#allocation2 + $0x8] sm:$0xff] 0.0
          %265 = vst [vmem:[#allocation2 + $0x10] sm:$0xff] 0.0
          %266 = vst [vmem:[#allocation2 + $0x18] sm:$0xff] 0.0
          %267 = vst [vmem:[#allocation2 + $0x20] sm:$0xff] 0.0
          %268 = vst [vmem:[#allocation2 + $0x28] sm:$0xff] 0.0
          %269 = vst [vmem:[#allocation2 + $0x30] sm:$0xff] 0.0
          %270 = vst [vmem:[#allocation2 + $0x38] sm:$0xff] 0.0
          %271 = vst [vmem:[#allocation2 + $0x40] sm:$0xff] 0.0
          %272 = vst [vmem:[#allocation2 + $0x48] sm:$0xff] 0.0
          %273 = vst [vmem:[#allocation2 + $0x50] sm:$0xff] 0.0
          %274 = vst [vmem:[#allocation2 + $0x58] sm:$0xff] 0.0
          %275 = vst [vmem:[#allocation2 + $0x60] sm:$0xff] 0.0
          %276 = vst [vmem:[#allocation2 + $0x68] sm:$0xff] 0.0
          %277 = vst [vmem:[#allocation2 + $0x70] sm:$0xff] 0.0
          %278 = vst [vmem:[#allocation2 + $0x78] sm:$0xff] 0.0
          %279 = vst [vmem:[#allocation2 + $0x80] sm:$0xff] 0.0
          %280 = vst [vmem:[#allocation2 + $0x88] sm:$0xff] 0.0
          %281 = vst [vmem:[#allocation2 + $0x90] sm:$0xff] 0.0
          %282 = vst [vmem:[#allocation2 + $0x98] sm:$0xff] 0.0
          %283 = vst [vmem:[#allocation2 + $0xa0] sm:$0xff] 0.0
          %284 = vst [vmem:[#allocation2 + $0xa8] sm:$0xff] 0.0
          %285 = vst [vmem:[#allocation2 + $0xb0] sm:$0xff] 0.0
          %286 = vst [vmem:[#allocation2 + $0xb8] sm:$0xff] 0.0
          %287 = vst [vmem:[#allocation2 + $0xc0] sm:$0xff] 0.0
          %288 = vst [vmem:[#allocation2 + $0xc8] sm:$0xff] 0.0
          %289 = vst [vmem:[#allocation2 + $0xd0] sm:$0xff] 0.0
          %290 = vst [vmem:[#allocation2 + $0xd8] sm:$0xff] 0.0
          %291 = vst [vmem:[#allocation2 + $0xe0] sm:$0xff] 0.0
          %292 = vst [vmem:[#allocation2 + $0xe8] sm:$0xff] 0.0
          %293 = vst [vmem:[#allocation2 + $0xf0] sm:$0xff] 0.0
          %294 = vst [vmem:[#allocation2 + $0xf8] sm:$0xff] 0.0
          %295 = vst [vmem:[#allocation2 + $0x100] sm:$0xff] 0.0
          %296 = vst [vmem:[#allocation2 + $0x108] sm:$0xff] 0.0
          %297 = vst [vmem:[#allocation2 + $0x110] sm:$0xff] 0.0
          %298 = vst [vmem:[#allocation2 + $0x118] sm:$0xff] 0.0
          %299 = vst [vmem:[#allocation2 + $0x120] sm:$0xff] 0.0
          %300 = vst [vmem:[#allocation2 + $0x128] sm:$0xff] 0.0
          %301 = vst [vmem:[#allocation2 + $0x130] sm:$0xff] 0.0
          %302 = vst [vmem:[#allocation2 + $0x138] sm:$0xff] 0.0
          %303 = vst [vmem:[#allocation2 + $0x140] sm:$0xff] 0.0
          %304 = vst [vmem:[#allocation2 + $0x148] sm:$0xff] 0.0
          %305 = vst [vmem:[#allocation2 + $0x150] sm:$0xff] 0.0
          %306 = vst [vmem:[#allocation2 + $0x158] sm:$0xff] 0.0
          %307 = vst [vmem:[#allocation2 + $0x160] sm:$0xff] 0.0
          %308 = vst [vmem:[#allocation2 + $0x168] sm:$0xff] 0.0
          %309 = vst [vmem:[#allocation2 + $0x170] sm:$0xff] 0.0
          %310 = vst [vmem:[#allocation2 + $0x178] sm:$0xff] 0.0
          %311 = vst [vmem:[#allocation2 + $0x180] sm:$0xff] 0.0
          %312 = vst [vmem:[#allocation2 + $0x188] sm:$0xff] 0.0
          %313 = vst [vmem:[#allocation2 + $0x190] sm:$0xff] 0.0
          %314 = vst [vmem:[#allocation2 + $0x198] sm:$0xff] 0.0
          %315 = vst [vmem:[#allocation2 + $0x1a0] sm:$0xff] 0.0
          %316 = vst [vmem:[#allocation2 + $0x1a8] sm:$0xff] 0.0
          %317 = vst [vmem:[#allocation2 + $0x1b0] sm:$0xff] 0.0
          %318 = vst [vmem:[#allocation2 + $0x1b8] sm:$0xff] 0.0
          %319 = vst [vmem:[#allocation2 + $0x1c0] sm:$0xff] 0.0
          %320 = vst [vmem:[#allocation2 + $0x1c8] sm:$0xff] 0.0
          %321 = vst [vmem:[#allocation2 + $0x1d0] sm:$0xff] 0.0
          %322 = vst [vmem:[#allocation2 + $0x1d8] sm:$0xff] 0.0
          %323 = vst [vmem:[#allocation2 + $0x1e0] sm:$0xff] 0.0
          %324 = vst [vmem:[#allocation2 + $0x1e8] sm:$0xff] 0.0
          %325 = vst [vmem:[#allocation2 + $0x1f0] sm:$0xff] 0.0
          %326 = vst [vmem:[#allocation2 + $0x1f8] sm:$0xff] 0.0
        $region40: #{tpu_custom_call.1} parent=27 // pred_fallthru
          _
        %v327 = vld [vmem:[#allocation2] sm:$0xff]
        %v328 = vld [vmem:[#allocation2 + $0x8] sm:$0xff]
        %v329 = vld [vmem:[#allocation2 + $0x10] sm:$0xff]
        %v330 = vld [vmem:[#allocation2 + $0x18] sm:$0xff]
        %v331 = vld [vmem:[#allocation2 + $0x20] sm:$0xff]
        %v332 = vld [vmem:[#allocation2 + $0x28] sm:$0xff]
        %v333 = vld [vmem:[#allocation2 + $0x30] sm:$0xff]
        %v334 = vld [vmem:[#allocation2 + $0x38] sm:$0xff]
        %v335 = vld [vmem:[#allocation2 + $0x40] sm:$0xff]
        %v336 = vld [vmem:[#allocation2 + $0x48] sm:$0xff]
        %v337 = vld [vmem:[#allocation2 + $0x50] sm:$0xff]
        %v338 = vld [vmem:[#allocation2 + $0x58] sm:$0xff]
        %v339 = vld [vmem:[#allocation2 + $0x60] sm:$0xff]
        %v340 = vld [vmem:[#allocation2 + $0x68] sm:$0xff]
        %v341 = vld [vmem:[#allocation2 + $0x70] sm:$0xff]
        %v342 = vld [vmem:[#allocation2 + $0x78] sm:$0xff]
        %v343 = vld [vmem:[#allocation2 + $0x80] sm:$0xff]
        %v344 = vld [vmem:[#allocation2 + $0x88] sm:$0xff]
        %v345 = vld [vmem:[#allocation2 + $0x90] sm:$0xff]
        %v346 = vld [vmem:[#allocation2 + $0x98] sm:$0xff]
        %v347 = vld [vmem:[#allocation2 + $0xa0] sm:$0xff]
        %v348 = vld [vmem:[#allocation2 + $0xa8] sm:$0xff]
        %v349 = vld [vmem:[#allocation2 + $0xb0] sm:$0xff]
        %v350 = vld [vmem:[#allocation2 + $0xb8] sm:$0xff]
        %v351 = vld [vmem:[#allocation2 + $0xc0] sm:$0xff]
        %v352 = vld [vmem:[#allocation2 + $0xc8] sm:$0xff]
        %v353 = vld [vmem:[#allocation2 + $0xd0] sm:$0xff]
        %v354 = vld [vmem:[#allocation2 + $0xd8] sm:$0xff]
        %v355 = vld [vmem:[#allocation2 + $0xe0] sm:$0xff]
        %v356 = vld [vmem:[#allocation2 + $0xe8] sm:$0xff]
        %v357 = vld [vmem:[#allocation2 + $0xf0] sm:$0xff]
        %v358 = vld [vmem:[#allocation2 + $0xf8] sm:$0xff]
        %v359 = vld [vmem:[#allocation2 + $0x100] sm:$0xff]
        %v360 = vld [vmem:[#allocation2 + $0x108] sm:$0xff]
        %v361 = vld [vmem:[#allocation2 + $0x110] sm:$0xff]
        %v362 = vld [vmem:[#allocation2 + $0x118] sm:$0xff]
        %v363 = vld [vmem:[#allocation2 + $0x120] sm:$0xff]
        %v364 = vld [vmem:[#allocation2 + $0x128] sm:$0xff]
        %v365 = vld [vmem:[#allocation2 + $0x130] sm:$0xff]
        %v366 = vld [vmem:[#allocation2 + $0x138] sm:$0xff]
        %v367 = vld [vmem:[#allocation2 + $0x140] sm:$0xff]
        %v368 = vld [vmem:[#allocation2 + $0x148] sm:$0xff]
        %v369 = vld [vmem:[#allocation2 + $0x150] sm:$0xff]
        %v370 = vld [vmem:[#allocation2 + $0x158] sm:$0xff]
        %v371 = vld [vmem:[#allocation2 + $0x160] sm:$0xff]
        %v372 = vld [vmem:[#allocation2 + $0x168] sm:$0xff]
        %v373 = vld [vmem:[#allocation2 + $0x170] sm:$0xff]
        %v374 = vld [vmem:[#allocation2 + $0x178] sm:$0xff]
        %v375 = vld [vmem:[#allocation2 + $0x180] sm:$0xff]
        %v376 = vld [vmem:[#allocation2 + $0x188] sm:$0xff]
        %v377 = vld [vmem:[#allocation2 + $0x190] sm:$0xff]
        %v378 = vld [vmem:[#allocation2 + $0x198] sm:$0xff]
        %v379 = vld [vmem:[#allocation2 + $0x1a0] sm:$0xff]
        %v380 = vld [vmem:[#allocation2 + $0x1a8] sm:$0xff]
        %v381 = vld [vmem:[#allocation2 + $0x1b0] sm:$0xff]
        %v382 = vld [vmem:[#allocation2 + $0x1b8] sm:$0xff]
        %v383 = vld [vmem:[#allocation2 + $0x1c0] sm:$0xff]
        %v384 = vld [vmem:[#allocation2 + $0x1c8] sm:$0xff]
        %v385 = vld [vmem:[#allocation2 + $0x1d0] sm:$0xff]
        %v386 = vld [vmem:[#allocation2 + $0x1d8] sm:$0xff]
        %v387 = vld [vmem:[#allocation2 + $0x1e0] sm:$0xff]
        %v388 = vld [vmem:[#allocation2 + $0x1e8] sm:$0xff]
        %v389 = vld [vmem:[#allocation2 + $0x1f0] sm:$0xff]
        %v390 = vld [vmem:[#allocation2 + $0x1f8] sm:$0xff]
        %v391 = vld [vmem:[%s222] sm:$0xff]
        %v392 = vld [vmem:[%s222 + $0x8] sm:$0xff]
        %v393 = vld [vmem:[%s222 + $0x10] sm:$0xff]
        %v394 = vld [vmem:[%s222 + $0x18] sm:$0xff]
        %v395 = vld [vmem:[%s222 + $0x20] sm:$0xff]
        %v396 = vld [vmem:[%s222 + $0x28] sm:$0xff]
        %v397 = vld [vmem:[%s222 + $0x30] sm:$0xff]
        %v398 = vld [vmem:[%s222 + $0x38] sm:$0xff]
        %v399 = vld [vmem:[%s222 + $0x40] sm:$0xff]
        %v400 = vld [vmem:[%s222 + $0x48] sm:$0xff]
        %v401 = vld [vmem:[%s222 + $0x50] sm:$0xff]
        %v402 = vld [vmem:[%s222 + $0x58] sm:$0xff]
        %v403 = vld [vmem:[%s222 + $0x60] sm:$0xff]
        %v404 = vld [vmem:[%s222 + $0x68] sm:$0xff]
        %v405 = vld [vmem:[%s222 + $0x70] sm:$0xff]
        %v406 = vld [vmem:[%s222 + $0x78] sm:$0xff]
        %v407 = vld [vmem:[%s222 + $0x80] sm:$0xff]
        %v408 = vld [vmem:[%s222 + $0x88] sm:$0xff]
        %v409 = vld [vmem:[%s222 + $0x90] sm:$0xff]
        %v410 = vld [vmem:[%s222 + $0x98] sm:$0xff]
        %v411 = vld [vmem:[%s222 + $0xa0] sm:$0xff]
        %v412 = vld [vmem:[%s222 + $0xa8] sm:$0xff]
        %v413 = vld [vmem:[%s222 + $0xb0] sm:$0xff]
        %v414 = vld [vmem:[%s222 + $0xb8] sm:$0xff]
        %v415 = vld [vmem:[%s222 + $0xc0] sm:$0xff]
        %v416 = vld [vmem:[%s222 + $0xc8] sm:$0xff]
        %v417 = vld [vmem:[%s222 + $0xd0] sm:$0xff]
        %v418 = vld [vmem:[%s222 + $0xd8] sm:$0xff]
        %v419 = vld [vmem:[%s222 + $0xe0] sm:$0xff]
        %v420 = vld [vmem:[%s222 + $0xe8] sm:$0xff]
        %v421 = vld [vmem:[%s222 + $0xf0] sm:$0xff]
        %v422 = vld [vmem:[%s222 + $0xf8] sm:$0xff]
        %v423 = vld [vmem:[%s222 + $0x100] sm:$0xff]
        %v424 = vld [vmem:[%s222 + $0x108] sm:$0xff]
        %v425 = vld [vmem:[%s222 + $0x110] sm:$0xff]
        %v426 = vld [vmem:[%s222 + $0x118] sm:$0xff]
        %v427 = vld [vmem:[%s222 + $0x120] sm:$0xff]
        %v428 = vld [vmem:[%s222 + $0x128] sm:$0xff]
        %v429 = vld [vmem:[%s222 + $0x130] sm:$0xff]
        %v430 = vld [vmem:[%s222 + $0x138] sm:$0xff]
        %v431 = vld [vmem:[%s222 + $0x140] sm:$0xff]
        %v432 = vld [vmem:[%s222 + $0x148] sm:$0xff]
        %v433 = vld [vmem:[%s222 + $0x150] sm:$0xff]
        %v434 = vld [vmem:[%s222 + $0x158] sm:$0xff]
        %v435 = vld [vmem:[%s222 + $0x160] sm:$0xff]
        %v436 = vld [vmem:[%s222 + $0x168] sm:$0xff]
        %v437 = vld [vmem:[%s222 + $0x170] sm:$0xff]
        %v438 = vld [vmem:[%s222 + $0x178] sm:$0xff]
        %v439 = vld [vmem:[%s222 + $0x180] sm:$0xff]
        %v440 = vld [vmem:[%s222 + $0x188] sm:$0xff]
        %v441 = vld [vmem:[%s222 + $0x190] sm:$0xff]
        %v442 = vld [vmem:[%s222 + $0x198] sm:$0xff]
        %v443 = vld [vmem:[%s222 + $0x1a0] sm:$0xff]
        %v444 = vld [vmem:[%s222 + $0x1a8] sm:$0xff]
        %v445 = vld [vmem:[%s222 + $0x1b0] sm:$0xff]
        %v446 = vld [vmem:[%s222 + $0x1b8] sm:$0xff]
        %v447 = vld [vmem:[%s222 + $0x1c0] sm:$0xff]
        %v448 = vld [vmem:[%s222 + $0x1c8] sm:$0xff]
        %v449 = vld [vmem:[%s222 + $0x1d0] sm:$0xff]
        %v450 = vld [vmem:[%s222 + $0x1d8] sm:$0xff]
        %v451 = vld [vmem:[%s222 + $0x1e0] sm:$0xff]
        %v452 = vld [vmem:[%s222 + $0x1e8] sm:$0xff]
        %v453 = vld [vmem:[%s222 + $0x1f0] sm:$0xff]
        %v454 = vld [vmem:[%s222 + $0x1f8] sm:$0xff]
        %v455 = vld [vmem:[#allocation6] sm:$0xf]
        %v456 = vld [vmem:[#allocation6 + $0x4] sm:$0xf]
        %v457 = vld [vmem:[#allocation6 + $0x8] sm:$0xf]
        %v458 = vld [vmem:[#allocation6 + $0xc] sm:$0xf]
        %v459 = vld [vmem:[#allocation6 + $0x10] sm:$0xf]
        %v460 = vld [vmem:[#allocation6 + $0x14] sm:$0xf]
        %v461 = vld [vmem:[#allocation6 + $0x18] sm:$0xf]
        %v462 = vld [vmem:[#allocation6 + $0x1c] sm:$0xf]
        %v463 = vld [vmem:[#allocation6 + $0x20] sm:$0xf]
        %v464 = vld [vmem:[#allocation6 + $0x24] sm:$0xf]
        %v465 = vld [vmem:[#allocation6 + $0x28] sm:$0xf]
        %v466 = vld [vmem:[#allocation6 + $0x2c] sm:$0xf]
        %v467 = vld [vmem:[#allocation6 + $0x30] sm:$0xf]
        %v468 = vld [vmem:[#allocation6 + $0x34] sm:$0xf]
        %v469 = vld [vmem:[#allocation6 + $0x38] sm:$0xf]
        %v470 = vld [vmem:[#allocation6 + $0x3c] sm:$0xf]
        %v471 = vld [vmem:[#allocation6 + $0x40] sm:$0xf]
        %v472 = vld [vmem:[#allocation6 + $0x44] sm:$0xf]
        %v473 = vld [vmem:[#allocation6 + $0x48] sm:$0xf]
        %v474 = vld [vmem:[#allocation6 + $0x4c] sm:$0xf]
        %v475 = vld [vmem:[#allocation6 + $0x50] sm:$0xf]
        %v476 = vld [vmem:[#allocation6 + $0x54] sm:$0xf]
        %v477 = vld [vmem:[#allocation6 + $0x58] sm:$0xf]
        %v478 = vld [vmem:[#allocation6 + $0x5c] sm:$0xf]
        %v479 = vld [vmem:[#allocation6 + $0x60] sm:$0xf]
        %v480 = vld [vmem:[#allocation6 + $0x64] sm:$0xf]
        %v481 = vld [vmem:[#allocation6 + $0x68] sm:$0xf]
        %v482 = vld [vmem:[#allocation6 + $0x6c] sm:$0xf]
        %v483 = vld [vmem:[#allocation6 + $0x70] sm:$0xf]
        %v484 = vld [vmem:[#allocation6 + $0x74] sm:$0xf]
        %v485 = vld [vmem:[#allocation6 + $0x78] sm:$0xf]
        %v486 = vld [vmem:[#allocation6 + $0x7c] sm:$0xf]
        %v551 = vunpack.c.l.b16 %v391
        %v552 = vunpack.c.h.b16 %v391
        %v553 = vunpack.c.l.b16 %v392
        %v554 = vunpack.c.h.b16 %v392
        %v555 = vunpack.c.l.b16 %v393
        %v556 = vunpack.c.h.b16 %v393
        %v557 = vunpack.c.l.b16 %v394
        %v558 = vunpack.c.h.b16 %v394
        %v559 = vunpack.c.l.b16 %v395
        %v560 = vunpack.c.h.b16 %v395
        %v561 = vunpack.c.l.b16 %v396
        %v562 = vunpack.c.h.b16 %v396
        %v563 = vunpack.c.l.b16 %v397
        %v564 = vunpack.c.h.b16 %v397
        %v565 = vunpack.c.l.b16 %v398
        %v566 = vunpack.c.h.b16 %v398
        %v567 = vunpack.c.l.b16 %v399
        %v568 = vunpack.c.h.b16 %v399
        %v569 = vunpack.c.l.b16 %v400
        %v570 = vunpack.c.h.b16 %v400
        %v571 = vunpack.c.l.b16 %v401
        %v572 = vunpack.c.h.b16 %v401
        %v573 = vunpack.c.l.b16 %v402
        %v574 = vunpack.c.h.b16 %v402
        %v575 = vunpack.c.l.b16 %v403
        %v576 = vunpack.c.h.b16 %v403
        %v577 = vunpack.c.l.b16 %v404
        %v578 = vunpack.c.h.b16 %v404
        %v579 = vunpack.c.l.b16 %v405
        %v580 = vunpack.c.h.b16 %v405
        %v581 = vunpack.c.l.b16 %v406
        %v582 = vunpack.c.h.b16 %v406
        %v583 = vunpack.c.l.b16 %v407
        %v584 = vunpack.c.h.b16 %v407
        %v585 = vunpack.c.l.b16 %v408
        %v586 = vunpack.c.h.b16 %v408
        %v587 = vunpack.c.l.b16 %v409
        %v588 = vunpack.c.h.b16 %v409
        %v589 = vunpack.c.l.b16 %v410
        %v590 = vunpack.c.h.b16 %v410
        %v591 = vunpack.c.l.b16 %v411
        %v592 = vunpack.c.h.b16 %v411
        %v593 = vunpack.c.l.b16 %v412
        %v594 = vunpack.c.h.b16 %v412
        %v595 = vunpack.c.l.b16 %v413
        %v596 = vunpack.c.h.b16 %v413
        %v597 = vunpack.c.l.b16 %v414
        %v598 = vunpack.c.h.b16 %v414
        %v599 = vunpack.c.l.b16 %v415
        %v600 = vunpack.c.h.b16 %v415
        %v601 = vunpack.c.l.b16 %v416
        %v602 = vunpack.c.h.b16 %v416
        %v603 = vunpack.c.l.b16 %v417
        %v604 = vunpack.c.h.b16 %v417
        %v605 = vunpack.c.l.b16 %v418
        %v606 = vunpack.c.h.b16 %v418
        %v607 = vunpack.c.l.b16 %v419
        %v608 = vunpack.c.h.b16 %v419
        %v609 = vunpack.c.l.b16 %v420
        %v610 = vunpack.c.h.b16 %v420
        %v611 = vunpack.c.l.b16 %v421
        %v612 = vunpack.c.h.b16 %v421
        %v613 = vunpack.c.l.b16 %v422
        %v614 = vunpack.c.h.b16 %v422
        %v615 = vunpack.c.l.b16 %v423
        %v616 = vunpack.c.h.b16 %v423
        %v617 = vunpack.c.l.b16 %v424
        %v618 = vunpack.c.h.b16 %v424
        %v619 = vunpack.c.l.b16 %v425
        %v620 = vunpack.c.h.b16 %v425
        %v621 = vunpack.c.l.b16 %v426
        %v622 = vunpack.c.h.b16 %v426
        %v623 = vunpack.c.l.b16 %v427
        %v624 = vunpack.c.h.b16 %v427
        %v625 = vunpack.c.l.b16 %v428
        %v626 = vunpack.c.h.b16 %v428
        %v627 = vunpack.c.l.b16 %v429
        %v628 = vunpack.c.h.b16 %v429
        %v629 = vunpack.c.l.b16 %v430
        %v630 = vunpack.c.h.b16 %v430
        %v631 = vunpack.c.l.b16 %v431
        %v632 = vunpack.c.h.b16 %v431
        %v633 = vunpack.c.l.b16 %v432
        %v634 = vunpack.c.h.b16 %v432
        %v635 = vunpack.c.l.b16 %v433
        %v636 = vunpack.c.h.b16 %v433
        %v637 = vunpack.c.l.b16 %v434
        %v638 = vunpack.c.h.b16 %v434
        %v639 = vunpack.c.l.b16 %v435
        %v640 = vunpack.c.h.b16 %v435
        %v641 = vunpack.c.l.b16 %v436
        %v642 = vunpack.c.h.b16 %v436
        %v643 = vunpack.c.l.b16 %v437
        %v644 = vunpack.c.h.b16 %v437
        %v645 = vunpack.c.l.b16 %v438
        %v646 = vunpack.c.h.b16 %v438
        %v647 = vunpack.c.l.b16 %v439
        %v648 = vunpack.c.h.b16 %v439
        %v649 = vunpack.c.l.b16 %v440
        %v650 = vunpack.c.h.b16 %v440
        %v651 = vunpack.c.l.b16 %v441
        %v652 = vunpack.c.h.b16 %v441
        %v653 = vunpack.c.l.b16 %v442
        %v654 = vunpack.c.h.b16 %v442
        %v655 = vunpack.c.l.b16 %v443
        %v656 = vunpack.c.h.b16 %v443
        %v657 = vunpack.c.l.b16 %v444
        %v658 = vunpack.c.h.b16 %v444
        %v659 = vunpack.c.l.b16 %v445
        %v660 = vunpack.c.h.b16 %v445
        %v661 = vunpack.c.l.b16 %v446
        %v662 = vunpack.c.h.b16 %v446
        %v663 = vunpack.c.l.b16 %v447
        %v664 = vunpack.c.h.b16 %v447
        %v665 = vunpack.c.l.b16 %v448
        %v666 = vunpack.c.h.b16 %v448
        %v667 = vunpack.c.l.b16 %v449
        %v668 = vunpack.c.h.b16 %v449
        %v669 = vunpack.c.l.b16 %v450
        %v670 = vunpack.c.h.b16 %v450
        %v671 = vunpack.c.l.b16 %v451
        %v672 = vunpack.c.h.b16 %v451
        %v673 = vunpack.c.l.b16 %v452
        %v674 = vunpack.c.h.b16 %v452
        %v675 = vunpack.c.l.b16 %v453
        %v676 = vunpack.c.h.b16 %v453
        %v677 = vunpack.c.l.b16 %v454
        %v678 = vunpack.c.h.b16 %v454
        %v679 = vpack.c.b16 %v553, %v551
        %v680 = vpack.c.b16 %v554, %v552
        %v681 = vpack.c.b16 %v557, %v555
        %v682 = vpack.c.b16 %v558, %v556
        %v683 = vpack.c.b16 %v561, %v559
        %v684 = vpack.c.b16 %v562, %v560
        %v685 = vpack.c.b16 %v565, %v563
        %v686 = vpack.c.b16 %v566, %v564
        %v687 = vpack.c.b16 %v569, %v567
        %v688 = vpack.c.b16 %v570, %v568
        %v689 = vpack.c.b16 %v573, %v571
        %v690 = vpack.c.b16 %v574, %v572
        %v691 = vpack.c.b16 %v577, %v575
        %v692 = vpack.c.b16 %v578, %v576
        %v693 = vpack.c.b16 %v581, %v579
        %v694 = vpack.c.b16 %v582, %v580
        %v695 = vpack.c.b16 %v585, %v583
        %v696 = vpack.c.b16 %v586, %v584
        %v697 = vpack.c.b16 %v589, %v587
        %v698 = vpack.c.b16 %v590, %v588
        %v699 = vpack.c.b16 %v593, %v591
        %v700 = vpack.c.b16 %v594, %v592
        %v701 = vpack.c.b16 %v597, %v595
        %v702 = vpack.c.b16 %v598, %v596
        %v703 = vpack.c.b16 %v601, %v599
        %v704 = vpack.c.b16 %v602, %v600
        %v705 = vpack.c.b16 %v605, %v603
        %v706 = vpack.c.b16 %v606, %v604
        %v707 = vpack.c.b16 %v609, %v607
        %v708 = vpack.c.b16 %v610, %v608
        %v709 = vpack.c.b16 %v613, %v611
        %v710 = vpack.c.b16 %v614, %v612
        %v711 = vpack.c.b16 %v617, %v615
        %v712 = vpack.c.b16 %v618, %v616
        %v713 = vpack.c.b16 %v621, %v619
        %v714 = vpack.c.b16 %v622, %v620
        %v715 = vpack.c.b16 %v625, %v623
        %v716 = vpack.c.b16 %v626, %v624
        %v717 = vpack.c.b16 %v629, %v627
        %v718 = vpack.c.b16 %v630, %v628
        %v719 = vpack.c.b16 %v633, %v631
        %v720 = vpack.c.b16 %v634, %v632
        %v721 = vpack.c.b16 %v637, %v635
        %v722 = vpack.c.b16 %v638, %v636
        %v723 = vpack.c.b16 %v641, %v639
        %v724 = vpack.c.b16 %v642, %v640
        %v725 = vpack.c.b16 %v645, %v643
        %v726 = vpack.c.b16 %v646, %v644
        %v727 = vpack.c.b16 %v649, %v647
        %v728 = vpack.c.b16 %v650, %v648
        %v729 = vpack.c.b16 %v653, %v651
        %v730 = vpack.c.b16 %v654, %v652
        %v731 = vpack.c.b16 %v657, %v655
        %v732 = vpack.c.b16 %v658, %v656
        %v733 = vpack.c.b16 %v661, %v659
        %v734 = vpack.c.b16 %v662, %v660
        %v735 = vpack.c.b16 %v665, %v663
        %v736 = vpack.c.b16 %v666, %v664
        %v737 = vpack.c.b16 %v669, %v667
        %v738 = vpack.c.b16 %v670, %v668
        %v739 = vpack.c.b16 %v673, %v671
        %v740 = vpack.c.b16 %v674, %v672
        %v741 = vpack.c.b16 %v677, %v675
        %v742 = vpack.c.b16 %v678, %v676
        %v839 = vunpack.c.l.b16 %v455
        %v840 = vunpack.c.l.b16 %v456
        %v841 = vunpack.c.l.b16 %v457
        %v842 = vunpack.c.l.b16 %v458
        %v843 = vunpack.c.l.b16 %v459
        %v844 = vunpack.c.l.b16 %v460
        %v845 = vunpack.c.l.b16 %v461
        %v846 = vunpack.c.l.b16 %v462
        %v847 = vunpack.c.l.b16 %v463
        %v848 = vunpack.c.l.b16 %v464
        %v849 = vunpack.c.l.b16 %v465
        %v850 = vunpack.c.l.b16 %v466
        %v851 = vunpack.c.l.b16 %v467
        %v852 = vunpack.c.l.b16 %v468
        %v853 = vunpack.c.l.b16 %v469
        %v854 = vunpack.c.l.b16 %v470
        %v855 = vunpack.c.l.b16 %v471
        %v856 = vunpack.c.l.b16 %v472
        %v857 = vunpack.c.l.b16 %v473
        %v858 = vunpack.c.l.b16 %v474
        %v859 = vunpack.c.l.b16 %v475
        %v860 = vunpack.c.l.b16 %v476
        %v861 = vunpack.c.l.b16 %v477
        %v862 = vunpack.c.l.b16 %v478
        %v863 = vunpack.c.l.b16 %v479
        %v864 = vunpack.c.l.b16 %v480
        %v865 = vunpack.c.l.b16 %v481
        %v866 = vunpack.c.l.b16 %v482
        %v867 = vunpack.c.l.b16 %v483
        %v868 = vunpack.c.l.b16 %v484
        %v869 = vunpack.c.l.b16 %v485
        %v870 = vunpack.c.l.b16 %v486
        %v871 = vpack.c.b16 %v840, %v839
        %v872 = vpack.c.b16 %v842, %v841
        %v873 = vpack.c.b16 %v844, %v843
        %v874 = vpack.c.b16 %v846, %v845
        %v875 = vpack.c.b16 %v848, %v847
        %v876 = vpack.c.b16 %v850, %v849
        %v877 = vpack.c.b16 %v852, %v851
        %v878 = vpack.c.b16 %v854, %v853
        %v879 = vpack.c.b16 %v856, %v855
        %v880 = vpack.c.b16 %v858, %v857
        %v881 = vpack.c.b16 %v860, %v859
        %v882 = vpack.c.b16 %v862, %v861
        %v883 = vpack.c.b16 %v864, %v863
        %v884 = vpack.c.b16 %v866, %v865
        %v885 = vpack.c.b16 %v868, %v867
        %v886 = vpack.c.b16 %v870, %v869
        %903 = vmatprep.subr.bf16.mxu0 0
        %904 = vmatpush1.bf16.msra.mxu0 %v878
        %905 = vmatprep.subr.bf16.mxu0 0
        %906 = vmatpush1.bf16.msra.mxu0 %v877
        %907 = vmatprep.subr.bf16.mxu0 0
        %908 = vmatpush1.bf16.msra.mxu0 %v876
        %909 = vmatprep.subr.bf16.mxu0 0
        %910 = vmatpush1.bf16.msra.mxu0 %v875
        %911 = vmatprep.subr.bf16.mxu0 0
        %912 = vmatpush1.bf16.msra.mxu0 %v874
        %913 = vmatprep.subr.bf16.mxu0 0
        %914 = vmatpush1.bf16.msra.mxu0 %v873
        %915 = vmatprep.subr.bf16.mxu0 0
        %916 = vmatpush1.bf16.msra.mxu0 %v872
        %917 = vmatprep.subr.bf16.mxu0 0
        %918 = vmatpush1.bf16.msra.mxu0 %v871
        %919 = vmatprep.subr.bf16.mxu0 0
        %920 = vmatpush2.bf16.msra.mxu0 %v886
        %921 = vmatprep.subr.bf16.mxu0 0
        %922 = vmatpush2.bf16.msra.mxu0 %v885
        %923 = vmatprep.subr.bf16.mxu0 0
        %924 = vmatpush2.bf16.msra.mxu0 %v884
        %925 = vmatprep.subr.bf16.mxu0 0
        %926 = vmatpush2.bf16.msra.mxu0 %v883
        %927 = vmatprep.subr.bf16.mxu0 0
        %928 = vmatpush2.bf16.msra.mxu0 %v882
        %929 = vmatprep.subr.bf16.mxu0 0
        %930 = vmatpush2.bf16.msra.mxu0 %v881
        %931 = vmatprep.subr.bf16.mxu0 0
        %932 = vmatpush2.bf16.msra.mxu0 %v880
        %933 = vmatprep.subr.bf16.mxu0 0
        %934 = vmatpush2.bf16.msra.mxu0 %v879
        %935 = vmatprep.mubr.bf16.mxu0 %v680
        %936 = vmatmul.mubr.bf16.gmra.mxu0 %v679
        %v937 = vpop.f32.mrf.mxu0
        %v938 = vadd.f32 0.0, %v937
        %v939 = vpop.f32.mrf.mxu0
        %v940 = vpop.f32.mrf.mxu0
        %v941 = vadd.f32 0.0, %v940
        %v942 = vpop.f32.mrf.mxu0
        %943 = vmatprep.mubr.bf16.mxu0 %v682
        %944 = vmatmul.mubr.bf16.gmra.mxu0 %v681
        %v945 = vpop.f32.mrf.mxu0
        %v946 = vadd.f32 0.0, %v945
        %v947 = vpop.f32.mrf.mxu0
        %v948 = vpop.f32.mrf.mxu0
        %v949 = vadd.f32 0.0, %v948
        %v950 = vpop.f32.mrf.mxu0
        %951 = vmatprep.mubr.bf16.mxu0 %v684
        %952 = vmatmul.mubr.bf16.gmra.mxu0 %v683
        %v953 = vpop.f32.mrf.mxu0
        %v954 = vadd.f32 0.0, %v953
        %v955 = vpop.f32.mrf.mxu0
        %v956 = vpop.f32.mrf.mxu0
        %v957 = vadd.f32 0.0, %v956
        %v958 = vpop.f32.mrf.mxu0
        %959 = vmatprep.mubr.bf16.mxu0 %v686
        %960 = vmatmul.mubr.bf16.gmra.mxu0 %v685
        %v961 = vpop.f32.mrf.mxu0
        %v962 = vadd.f32 0.0, %v961
        %v963 = vpop.f32.mrf.mxu0
        %v964 = vpop.f32.mrf.mxu0
        %v965 = vadd.f32 0.0, %v964
        %v966 = vpop.f32.mrf.mxu0
        %967 = vmatprep.mubr.bf16.mxu0 %v688
        %968 = vmatmul.mubr.bf16.gmra.mxu0 %v687
        %v969 = vpop.f32.mrf.mxu0
        %v970 = vadd.f32 0.0, %v969
        %v971 = vpop.f32.mrf.mxu0
        %v972 = vpop.f32.mrf.mxu0
        %v973 = vadd.f32 0.0, %v972
        %v974 = vpop.f32.mrf.mxu0
        %975 = vmatprep.mubr.bf16.mxu0 %v690
        %976 = vmatmul.mubr.bf16.gmra.mxu0 %v689
        %v977 = vpop.f32.mrf.mxu0
        %v978 = vadd.f32 0.0, %v977
        %v979 = vpop.f32.mrf.mxu0
        %v980 = vpop.f32.mrf.mxu0
        %v981 = vadd.f32 0.0, %v980
        %v982 = vpop.f32.mrf.mxu0
        %983 = vmatprep.mubr.bf16.mxu0 %v692
        %984 = vmatmul.mubr.bf16.gmra.mxu0 %v691
        %v985 = vpop.f32.mrf.mxu0
        %v986 = vadd.f32 0.0, %v985
        %v987 = vpop.f32.mrf.mxu0
        %v988 = vpop.f32.mrf.mxu0
        %v989 = vadd.f32 0.0, %v988
        %v990 = vpop.f32.mrf.mxu0
        %991 = vmatprep.mubr.bf16.mxu0 %v694
        %992 = vmatmul.mubr.bf16.gmra.mxu0 %v693
        %v993 = vpop.f32.mrf.mxu0
        %v994 = vadd.f32 0.0, %v993
        %v995 = vpop.f32.mrf.mxu0
        %v996 = vpop.f32.mrf.mxu0
        %v997 = vadd.f32 0.0, %v996
        %v998 = vpop.f32.mrf.mxu0
        %999 = vmatprep.mubr.bf16.mxu0 %v696
        %1000 = vmatmul.mubr.bf16.gmra.mxu0 %v695
        %v1001 = vpop.f32.mrf.mxu0
        %v1002 = vadd.f32 0.0, %v1001
        %v1003 = vpop.f32.mrf.mxu0
        %v1004 = vpop.f32.mrf.mxu0
        %v1005 = vadd.f32 0.0, %v1004
        %v1006 = vpop.f32.mrf.mxu0
        %1007 = vmatprep.mubr.bf16.mxu0 %v698
        %1008 = vmatmul.mubr.bf16.gmra.mxu0 %v697
        %v1009 = vpop.f32.mrf.mxu0
        %v1010 = vadd.f32 0.0, %v1009
        %v1011 = vpop.f32.mrf.mxu0
        %v1012 = vpop.f32.mrf.mxu0
        %v1013 = vadd.f32 0.0, %v1012
        %v1014 = vpop.f32.mrf.mxu0
        %1015 = vmatprep.mubr.bf16.mxu0 %v700
        %1016 = vmatmul.mubr.bf16.gmra.mxu0 %v699
        %v1017 = vpop.f32.mrf.mxu0
        %v1018 = vadd.f32 0.0, %v1017
        %v1019 = vpop.f32.mrf.mxu0
        %v1020 = vpop.f32.mrf.mxu0
        %v1021 = vadd.f32 0.0, %v1020
        %v1022 = vpop.f32.mrf.mxu0
        %1023 = vmatprep.mubr.bf16.mxu0 %v702
        %1024 = vmatmul.mubr.bf16.gmra.mxu0 %v701
        %v1025 = vpop.f32.mrf.mxu0
        %v1026 = vadd.f32 0.0, %v1025
        %v1027 = vpop.f32.mrf.mxu0
        %v1028 = vpop.f32.mrf.mxu0
        %v1029 = vadd.f32 0.0, %v1028
        %v1030 = vpop.f32.mrf.mxu0
        %1031 = vmatprep.mubr.bf16.mxu0 %v704
        %1032 = vmatmul.mubr.bf16.gmra.mxu0 %v703
        %v1033 = vpop.f32.mrf.mxu0
        %v1034 = vadd.f32 0.0, %v1033
        %v1035 = vpop.f32.mrf.mxu0
        %v1036 = vpop.f32.mrf.mxu0
        %v1037 = vadd.f32 0.0, %v1036
        %v1038 = vpop.f32.mrf.mxu0
        %1039 = vmatprep.mubr.bf16.mxu0 %v706
        %1040 = vmatmul.mubr.bf16.gmra.mxu0 %v705
        %v1041 = vpop.f32.mrf.mxu0
        %v1042 = vadd.f32 0.0, %v1041
        %v1043 = vpop.f32.mrf.mxu0
        %v1044 = vpop.f32.mrf.mxu0
        %v1045 = vadd.f32 0.0, %v1044
        %v1046 = vpop.f32.mrf.mxu0
        %1047 = vmatprep.mubr.bf16.mxu0 %v708
        %1048 = vmatmul.mubr.bf16.gmra.mxu0 %v707
        %v1049 = vpop.f32.mrf.mxu0
        %v1050 = vadd.f32 0.0, %v1049
        %v1051 = vpop.f32.mrf.mxu0
        %v1052 = vpop.f32.mrf.mxu0
        %v1053 = vadd.f32 0.0, %v1052
        %v1054 = vpop.f32.mrf.mxu0
        %1055 = vmatprep.mubr.bf16.mxu0 %v710
        %1056 = vmatmul.mubr.bf16.gmra.mxu0 %v709
        %v1057 = vpop.f32.mrf.mxu0
        %v1058 = vadd.f32 0.0, %v1057
        %v1059 = vpop.f32.mrf.mxu0
        %v1060 = vpop.f32.mrf.mxu0
        %v1061 = vadd.f32 0.0, %v1060
        %v1062 = vpop.f32.mrf.mxu0
        %1063 = vmatprep.mubr.bf16.mxu0 %v712
        %1064 = vmatmul.mubr.bf16.gmra.mxu0 %v711
        %v1065 = vpop.f32.mrf.mxu0
        %v1066 = vadd.f32 0.0, %v1065
        %v1067 = vpop.f32.mrf.mxu0
        %v1068 = vpop.f32.mrf.mxu0
        %v1069 = vadd.f32 0.0, %v1068
        %v1070 = vpop.f32.mrf.mxu0
        %1071 = vmatprep.mubr.bf16.mxu0 %v714
        %1072 = vmatmul.mubr.bf16.gmra.mxu0 %v713
        %v1073 = vpop.f32.mrf.mxu0
        %v1074 = vadd.f32 0.0, %v1073
        %v1075 = vpop.f32.mrf.mxu0
        %v1076 = vpop.f32.mrf.mxu0
        %v1077 = vadd.f32 0.0, %v1076
        %v1078 = vpop.f32.mrf.mxu0
        %1079 = vmatprep.mubr.bf16.mxu0 %v716
        %1080 = vmatmul.mubr.bf16.gmra.mxu0 %v715
        %v1081 = vpop.f32.mrf.mxu0
        %v1082 = vadd.f32 0.0, %v1081
        %v1083 = vpop.f32.mrf.mxu0
        %v1084 = vpop.f32.mrf.mxu0
        %v1085 = vadd.f32 0.0, %v1084
        %v1086 = vpop.f32.mrf.mxu0
        %1087 = vmatprep.mubr.bf16.mxu0 %v718
        %1088 = vmatmul.mubr.bf16.gmra.mxu0 %v717
        %v1089 = vpop.f32.mrf.mxu0
        %v1090 = vadd.f32 0.0, %v1089
        %v1091 = vpop.f32.mrf.mxu0
        %v1092 = vpop.f32.mrf.mxu0
        %v1093 = vadd.f32 0.0, %v1092
        %v1094 = vpop.f32.mrf.mxu0
        %1095 = vmatprep.mubr.bf16.mxu0 %v720
        %1096 = vmatmul.mubr.bf16.gmra.mxu0 %v719
        %v1097 = vpop.f32.mrf.mxu0
        %v1098 = vadd.f32 0.0, %v1097
        %v1099 = vpop.f32.mrf.mxu0
        %v1100 = vpop.f32.mrf.mxu0
        %v1101 = vadd.f32 0.0, %v1100
        %v1102 = vpop.f32.mrf.mxu0
        %1103 = vmatprep.mubr.bf16.mxu0 %v722
        %1104 = vmatmul.mubr.bf16.gmra.mxu0 %v721
        %v1105 = vpop.f32.mrf.mxu0
        %v1106 = vadd.f32 0.0, %v1105
        %v1107 = vpop.f32.mrf.mxu0
        %v1108 = vpop.f32.mrf.mxu0
        %v1109 = vadd.f32 0.0, %v1108
        %v1110 = vpop.f32.mrf.mxu0
        %1111 = vmatprep.mubr.bf16.mxu0 %v724
        %1112 = vmatmul.mubr.bf16.gmra.mxu0 %v723
        %v1113 = vpop.f32.mrf.mxu0
        %v1114 = vadd.f32 0.0, %v1113
        %v1115 = vpop.f32.mrf.mxu0
        %v1116 = vpop.f32.mrf.mxu0
        %v1117 = vadd.f32 0.0, %v1116
        %v1118 = vpop.f32.mrf.mxu0
        %1119 = vmatprep.mubr.bf16.mxu0 %v726
        %1120 = vmatmul.mubr.bf16.gmra.mxu0 %v725
        %v1121 = vpop.f32.mrf.mxu0
        %v1122 = vadd.f32 0.0, %v1121
        %v1123 = vpop.f32.mrf.mxu0
        %v1124 = vpop.f32.mrf.mxu0
        %v1125 = vadd.f32 0.0, %v1124
        %v1126 = vpop.f32.mrf.mxu0
        %1127 = vmatprep.mubr.bf16.mxu0 %v728
        %1128 = vmatmul.mubr.bf16.gmra.mxu0 %v727
        %v1129 = vpop.f32.mrf.mxu0
        %v1130 = vadd.f32 0.0, %v1129
        %v1131 = vpop.f32.mrf.mxu0
        %v1132 = vpop.f32.mrf.mxu0
        %v1133 = vadd.f32 0.0, %v1132
        %v1134 = vpop.f32.mrf.mxu0
        %1135 = vmatprep.mubr.bf16.mxu0 %v730
        %1136 = vmatmul.mubr.bf16.gmra.mxu0 %v729
        %v1137 = vpop.f32.mrf.mxu0
        %v1138 = vadd.f32 0.0, %v1137
        %v1139 = vpop.f32.mrf.mxu0
        %v1140 = vpop.f32.mrf.mxu0
        %v1141 = vadd.f32 0.0, %v1140
        %v1142 = vpop.f32.mrf.mxu0
        %1143 = vmatprep.mubr.bf16.mxu0 %v732
        %1144 = vmatmul.mubr.bf16.gmra.mxu0 %v731
        %v1145 = vpop.f32.mrf.mxu0
        %v1146 = vadd.f32 0.0, %v1145
        %v1147 = vpop.f32.mrf.mxu0
        %v1148 = vpop.f32.mrf.mxu0
        %v1149 = vadd.f32 0.0, %v1148
        %v1150 = vpop.f32.mrf.mxu0
        %1151 = vmatprep.mubr.bf16.mxu0 %v734
        %1152 = vmatmul.mubr.bf16.gmra.mxu0 %v733
        %v1153 = vpop.f32.mrf.mxu0
        %v1154 = vadd.f32 0.0, %v1153
        %v1155 = vpop.f32.mrf.mxu0
        %v1156 = vpop.f32.mrf.mxu0
        %v1157 = vadd.f32 0.0, %v1156
        %v1158 = vpop.f32.mrf.mxu0
        %1159 = vmatprep.mubr.bf16.mxu0 %v736
        %1160 = vmatmul.mubr.bf16.gmra.mxu0 %v735
        %v1161 = vpop.f32.mrf.mxu0
        %v1162 = vadd.f32 0.0, %v1161
        %v1163 = vpop.f32.mrf.mxu0
        %v1164 = vpop.f32.mrf.mxu0
        %v1165 = vadd.f32 0.0, %v1164
        %v1166 = vpop.f32.mrf.mxu0
        %1167 = vmatprep.mubr.bf16.mxu0 %v738
        %1168 = vmatmul.mubr.bf16.gmra.mxu0 %v737
        %v1169 = vpop.f32.mrf.mxu0
        %v1170 = vadd.f32 0.0, %v1169
        %v1171 = vpop.f32.mrf.mxu0
        %v1172 = vpop.f32.mrf.mxu0
        %v1173 = vadd.f32 0.0, %v1172
        %v1174 = vpop.f32.mrf.mxu0
        %1175 = vmatprep.mubr.bf16.mxu0 %v740
        %1176 = vmatmul.mubr.bf16.gmra.mxu0 %v739
        %v1177 = vpop.f32.mrf.mxu0
        %v1178 = vadd.f32 0.0, %v1177
        %v1179 = vpop.f32.mrf.mxu0
        %v1180 = vpop.f32.mrf.mxu0
        %v1181 = vadd.f32 0.0, %v1180
        %v1182 = vpop.f32.mrf.mxu0
        %1183 = vmatprep.mubr.bf16.mxu0 %v742
        %1184 = vmatmul.mubr.bf16.gmra.mxu0 %v741
        %v1185 = vpop.f32.mrf.mxu0
        %v1186 = vadd.f32 0.0, %v1185
        %v1187 = vpop.f32.mrf.mxu0
        %v1188 = vpop.f32.mrf.mxu0
        %v1189 = vadd.f32 0.0, %v1188
        %v1190 = vpop.f32.mrf.mxu0
        %1191 = vdwg.mxu0
        %v1192 = vadd.f32 %v327, %v938
        %v1193 = vadd.f32 %v328, %v941
        %v1194 = vadd.f32 %v329, %v946
        %v1195 = vadd.f32 %v330, %v949
        %v1196 = vadd.f32 %v331, %v954
        %v1197 = vadd.f32 %v332, %v957
        %v1198 = vadd.f32 %v333, %v962
        %v1199 = vadd.f32 %v334, %v965
        %v1200 = vadd.f32 %v335, %v970
        %v1201 = vadd.f32 %v336, %v973
        %v1202 = vadd.f32 %v337, %v978
        %v1203 = vadd.f32 %v338, %v981
        %v1204 = vadd.f32 %v339, %v986
        %v1205 = vadd.f32 %v340, %v989
        %v1206 = vadd.f32 %v341, %v994
        %v1207 = vadd.f32 %v342, %v997
        %v1208 = vadd.f32 %v343, %v1002
        %v1209 = vadd.f32 %v344, %v1005
        %v1210 = vadd.f32 %v345, %v1010
        %v1211 = vadd.f32 %v346, %v1013
        %v1212 = vadd.f32 %v347, %v1018
        %v1213 = vadd.f32 %v348, %v1021
        %v1214 = vadd.f32 %v349, %v1026
        %v1215 = vadd.f32 %v350, %v1029
        %v1216 = vadd.f32 %v351, %v1034
        %v1217 = vadd.f32 %v352, %v1037
        %v1218 = vadd.f32 %v353, %v1042
        %v1219 = vadd.f32 %v354, %v1045
        %v1220 = vadd.f32 %v355, %v1050
        %v1221 = vadd.f32 %v356, %v1053
        %v1222 = vadd.f32 %v357, %v1058
        %v1223 = vadd.f32 %v358, %v1061
        %v1224 = vadd.f32 %v359, %v1066
        %v1225 = vadd.f32 %v360, %v1069
        %v1226 = vadd.f32 %v361, %v1074
        %v1227 = vadd.f32 %v362, %v1077
        %v1228 = vadd.f32 %v363, %v1082
        %v1229 = vadd.f32 %v364, %v1085
        %v1230 = vadd.f32 %v365, %v1090
        %v1231 = vadd.f32 %v366, %v1093
        %v1232 = vadd.f32 %v367, %v1098
        %v1233 = vadd.f32 %v368, %v1101
        %v1234 = vadd.f32 %v369, %v1106
        %v1235 = vadd.f32 %v370, %v1109
        %v1236 = vadd.f32 %v371, %v1114
        %v1237 = vadd.f32 %v372, %v1117
        %v1238 = vadd.f32 %v373, %v1122
        %v1239 = vadd.f32 %v374, %v1125
        %v1240 = vadd.f32 %v375, %v1130
        %v1241 = vadd.f32 %v376, %v1133
        %v1242 = vadd.f32 %v377, %v1138
        %v1243 = vadd.f32 %v378, %v1141
        %v1244 = vadd.f32 %v379, %v1146
        %v1245 = vadd.f32 %v380, %v1149
        %v1246 = vadd.f32 %v381, %v1154
        %v1247 = vadd.f32 %v382, %v1157
        %v1248 = vadd.f32 %v383, %v1162
        %v1249 = vadd.f32 %v384, %v1165
        %v1250 = vadd.f32 %v385, %v1170
        %v1251 = vadd.f32 %v386, %v1173
        %v1252 = vadd.f32 %v387, %v1178
        %v1253 = vadd.f32 %v388, %v1181
        %v1254 = vadd.f32 %v389, %v1186
        %v1255 = vadd.f32 %v390, %v1189
        %1256 = vst [vmem:[#allocation2] sm:$0xff] %v1192
        %1257 = vst [vmem:[#allocation2 + $0x8] sm:$0xff] %v1193
        %1258 = vst [vmem:[#allocation2 + $0x10] sm:$0xff] %v1194
        %1259 = vst [vmem:[#allocation2 + $0x18] sm:$0xff] %v1195
        %1260 = vst [vmem:[#allocation2 + $0x20] sm:$0xff] %v1196
        %1261 = vst [vmem:[#allocation2 + $0x28] sm:$0xff] %v1197
        %1262 = vst [vmem:[#allocation2 + $0x30] sm:$0xff] %v1198
        %1263 = vst [vmem:[#allocation2 + $0x38] sm:$0xff] %v1199
        %1264 = vst [vmem:[#allocation2 + $0x40] sm:$0xff] %v1200
        %1265 = vst [vmem:[#allocation2 + $0x48] sm:$0xff] %v1201
        %1266 = vst [vmem:[#allocation2 + $0x50] sm:$0xff] %v1202
        %1267 = vst [vmem:[#allocation2 + $0x58] sm:$0xff] %v1203
        %1268 = vst [vmem:[#allocation2 + $0x60] sm:$0xff] %v1204
        %1269 = vst [vmem:[#allocation2 + $0x68] sm:$0xff] %v1205
        %1270 = vst [vmem:[#allocation2 + $0x70] sm:$0xff] %v1206
        %1271 = vst [vmem:[#allocation2 + $0x78] sm:$0xff] %v1207
        %1272 = vst [vmem:[#allocation2 + $0x80] sm:$0xff] %v1208
        %1273 = vst [vmem:[#allocation2 + $0x88] sm:$0xff] %v1209
        %1274 = vst [vmem:[#allocation2 + $0x90] sm:$0xff] %v1210
        %1275 = vst [vmem:[#allocation2 + $0x98] sm:$0xff] %v1211
        %1276 = vst [vmem:[#allocation2 + $0xa0] sm:$0xff] %v1212
        %1277 = vst [vmem:[#allocation2 + $0xa8] sm:$0xff] %v1213
        %1278 = vst [vmem:[#allocation2 + $0xb0] sm:$0xff] %v1214
        %1279 = vst [vmem:[#allocation2 + $0xb8] sm:$0xff] %v1215
        %1280 = vst [vmem:[#allocation2 + $0xc0] sm:$0xff] %v1216
        %1281 = vst [vmem:[#allocation2 + $0xc8] sm:$0xff] %v1217
        %1282 = vst [vmem:[#allocation2 + $0xd0] sm:$0xff] %v1218
        %1283 = vst [vmem:[#allocation2 + $0xd8] sm:$0xff] %v1219
        %1284 = vst [vmem:[#allocation2 + $0xe0] sm:$0xff] %v1220
        %1285 = vst [vmem:[#allocation2 + $0xe8] sm:$0xff] %v1221
        %1286 = vst [vmem:[#allocation2 + $0xf0] sm:$0xff] %v1222
        %1287 = vst [vmem:[#allocation2 + $0xf8] sm:$0xff] %v1223
        %1288 = vst [vmem:[#allocation2 + $0x100] sm:$0xff] %v1224
        %1289 = vst [vmem:[#allocation2 + $0x108] sm:$0xff] %v1225
        %1290 = vst [vmem:[#allocation2 + $0x110] sm:$0xff] %v1226
        %1291 = vst [vmem:[#allocation2 + $0x118] sm:$0xff] %v1227
        %1292 = vst [vmem:[#allocation2 + $0x120] sm:$0xff] %v1228
        %1293 = vst [vmem:[#allocation2 + $0x128] sm:$0xff] %v1229
        %1294 = vst [vmem:[#allocation2 + $0x130] sm:$0xff] %v1230
        %1295 = vst [vmem:[#allocation2 + $0x138] sm:$0xff] %v1231
        %1296 = vst [vmem:[#allocation2 + $0x140] sm:$0xff] %v1232
        %1297 = vst [vmem:[#allocation2 + $0x148] sm:$0xff] %v1233
        %1298 = vst [vmem:[#allocation2 + $0x150] sm:$0xff] %v1234
        %1299 = vst [vmem:[#allocation2 + $0x158] sm:$0xff] %v1235
        %1300 = vst [vmem:[#allocation2 + $0x160] sm:$0xff] %v1236
        %1301 = vst [vmem:[#allocation2 + $0x168] sm:$0xff] %v1237
        %1302 = vst [vmem:[#allocation2 + $0x170] sm:$0xff] %v1238
        %1303 = vst [vmem:[#allocation2 + $0x178] sm:$0xff] %v1239
        %1304 = vst [vmem:[#allocation2 + $0x180] sm:$0xff] %v1240
        %1305 = vst [vmem:[#allocation2 + $0x188] sm:$0xff] %v1241
        %1306 = vst [vmem:[#allocation2 + $0x190] sm:$0xff] %v1242
        %1307 = vst [vmem:[#allocation2 + $0x198] sm:$0xff] %v1243
        %1308 = vst [vmem:[#allocation2 + $0x1a0] sm:$0xff] %v1244
        %1309 = vst [vmem:[#allocation2 + $0x1a8] sm:$0xff] %v1245
        %1310 = vst [vmem:[#allocation2 + $0x1b0] sm:$0xff] %v1246
        %1311 = vst [vmem:[#allocation2 + $0x1b8] sm:$0xff] %v1247
        %1312 = vst [vmem:[#allocation2 + $0x1c0] sm:$0xff] %v1248
        %1313 = vst [vmem:[#allocation2 + $0x1c8] sm:$0xff] %v1249
        %1314 = vst [vmem:[#allocation2 + $0x1d0] sm:$0xff] %v1250
        %1315 = vst [vmem:[#allocation2 + $0x1d8] sm:$0xff] %v1251
        %1316 = vst [vmem:[#allocation2 + $0x1e0] sm:$0xff] %v1252
        %1317 = vst [vmem:[#allocation2 + $0x1e8] sm:$0xff] %v1253
        %1318 = vst [vmem:[#allocation2 + $0x1f0] sm:$0xff] %v1254
        %1319 = vst [vmem:[#allocation2 + $0x1f8] sm:$0xff] %v1255
        // Predicated region
        $region41: #{tpu_custom_call.1} parent=27 // pred_check
          %p1320 = pneg %p259
        $region42: #{tpu_custom_call.1} parent=27 // pred_check_branch
          %1322 = sbr.rel (%p1320) target = $region44
        $region43: #{tpu_custom_call.1} parent=27 // pred_region
          %v1323 = vld [vmem:[#allocation2] sm:$0xff]
          %v1324 = vld [vmem:[#allocation2 + $0x8] sm:$0xff]
          %v1325 = vld [vmem:[#allocation2 + $0x10] sm:$0xff]
          %v1326 = vld [vmem:[#allocation2 + $0x18] sm:$0xff]
          %v1327 = vld [vmem:[#allocation2 + $0x20] sm:$0xff]
          %v1328 = vld [vmem:[#allocation2 + $0x28] sm:$0xff]
          %v1329 = vld [vmem:[#allocation2 + $0x30] sm:$0xff]
          %v1330 = vld [vmem:[#allocation2 + $0x38] sm:$0xff]
          %v1331 = vld [vmem:[#allocation2 + $0x40] sm:$0xff]
          %v1332 = vld [vmem:[#allocation2 + $0x48] sm:$0xff]
          %v1333 = vld [vmem:[#allocation2 + $0x50] sm:$0xff]
          %v1334 = vld [vmem:[#allocation2 + $0x58] sm:$0xff]
          %v1335 = vld [vmem:[#allocation2 + $0x60] sm:$0xff]
          %v1336 = vld [vmem:[#allocation2 + $0x68] sm:$0xff]
          %v1337 = vld [vmem:[#allocation2 + $0x70] sm:$0xff]
          %v1338 = vld [vmem:[#allocation2 + $0x78] sm:$0xff]
          %v1339 = vld [vmem:[#allocation2 + $0x80] sm:$0xff]
          %v1340 = vld [vmem:[#allocation2 + $0x88] sm:$0xff]
          %v1341 = vld [vmem:[#allocation2 + $0x90] sm:$0xff]
          %v1342 = vld [vmem:[#allocation2 + $0x98] sm:$0xff]
          %v1343 = vld [vmem:[#allocation2 + $0xa0] sm:$0xff]
          %v1344 = vld [vmem:[#allocation2 + $0xa8] sm:$0xff]
          %v1345 = vld [vmem:[#allocation2 + $0xb0] sm:$0xff]
          %v1346 = vld [vmem:[#allocation2 + $0xb8] sm:$0xff]
          %v1347 = vld [vmem:[#allocation2 + $0xc0] sm:$0xff]
          %v1348 = vld [vmem:[#allocation2 + $0xc8] sm:$0xff]
          %v1349 = vld [vmem:[#allocation2 + $0xd0] sm:$0xff]
          %v1350 = vld [vmem:[#allocation2 + $0xd8] sm:$0xff]
          %v1351 = vld [vmem:[#allocation2 + $0xe0] sm:$0xff]
          %v1352 = vld [vmem:[#allocation2 + $0xe8] sm:$0xff]
          %v1353 = vld [vmem:[#allocation2 + $0xf0] sm:$0xff]
          %v1354 = vld [vmem:[#allocation2 + $0xf8] sm:$0xff]
          %v1355 = vld [vmem:[#allocation2 + $0x100] sm:$0xff]
          %v1356 = vld [vmem:[#allocation2 + $0x108] sm:$0xff]
          %v1357 = vld [vmem:[#allocation2 + $0x110] sm:$0xff]
          %v1358 = vld [vmem:[#allocation2 + $0x118] sm:$0xff]
          %v1359 = vld [vmem:[#allocation2 + $0x120] sm:$0xff]
          %v1360 = vld [vmem:[#allocation2 + $0x128] sm:$0xff]
          %v1361 = vld [vmem:[#allocation2 + $0x130] sm:$0xff]
          %v1362 = vld [vmem:[#allocation2 + $0x138] sm:$0xff]
          %v1363 = vld [vmem:[#allocation2 + $0x140] sm:$0xff]
          %v1364 = vld [vmem:[#allocation2 + $0x148] sm:$0xff]
          %v1365 = vld [vmem:[#allocation2 + $0x150] sm:$0xff]
          %v1366 = vld [vmem:[#allocation2 + $0x158] sm:$0xff]
          %v1367 = vld [vmem:[#allocation2 + $0x160] sm:$0xff]
          %v1368 = vld [vmem:[#allocation2 + $0x168] sm:$0xff]
          %v1369 = vld [vmem:[#allocation2 + $0x170] sm:$0xff]
          %v1370 = vld [vmem:[#allocation2 + $0x178] sm:$0xff]
          %v1371 = vld [vmem:[#allocation2 + $0x180] sm:$0xff]
          %v1372 = vld [vmem:[#allocation2 + $0x188] sm:$0xff]
          %v1373 = vld [vmem:[#allocation2 + $0x190] sm:$0xff]
          %v1374 = vld [vmem:[#allocation2 + $0x198] sm:$0xff]
          %v1375 = vld [vmem:[#allocation2 + $0x1a0] sm:$0xff]
          %v1376 = vld [vmem:[#allocation2 + $0x1a8] sm:$0xff]
          %v1377 = vld [vmem:[#allocation2 + $0x1b0] sm:$0xff]
          %v1378 = vld [vmem:[#allocation2 + $0x1b8] sm:$0xff]
          %v1379 = vld [vmem:[#allocation2 + $0x1c0] sm:$0xff]
          %v1380 = vld [vmem:[#allocation2 + $0x1c8] sm:$0xff]
          %v1381 = vld [vmem:[#allocation2 + $0x1d0] sm:$0xff]
          %v1382 = vld [vmem:[#allocation2 + $0x1d8] sm:$0xff]
          %v1383 = vld [vmem:[#allocation2 + $0x1e0] sm:$0xff]
          %v1384 = vld [vmem:[#allocation2 + $0x1e8] sm:$0xff]
          %v1385 = vld [vmem:[#allocation2 + $0x1f0] sm:$0xff]
          %v1386 = vld [vmem:[#allocation2 + $0x1f8] sm:$0xff]
          %v1387 = vpack.c.bf16 %v1324, %v1323
          %v1388 = vpack.c.bf16 %v1326, %v1325
          %v1389 = vpack.c.bf16 %v1328, %v1327
          %v1390 = vpack.c.bf16 %v1330, %v1329
          %v1391 = vpack.c.bf16 %v1332, %v1331
          %v1392 = vpack.c.bf16 %v1334, %v1333
          %v1393 = vpack.c.bf16 %v1336, %v1335
          %v1394 = vpack.c.bf16 %v1338, %v1337
          %v1395 = vpack.c.bf16 %v1340, %v1339
          %v1396 = vpack.c.bf16 %v1342, %v1341
          %v1397 = vpack.c.bf16 %v1344, %v1343
          %v1398 = vpack.c.bf16 %v1346, %v1345
          %v1399 = vpack.c.bf16 %v1348, %v1347
          %v1400 = vpack.c.bf16 %v1350, %v1349
          %v1401 = vpack.c.bf16 %v1352, %v1351
          %v1402 = vpack.c.bf16 %v1354, %v1353
          %v1403 = vpack.c.bf16 %v1356, %v1355
          %v1404 = vpack.c.bf16 %v1358, %v1357
          %v1405 = vpack.c.bf16 %v1360, %v1359
          %v1406 = vpack.c.bf16 %v1362, %v1361
          %v1407 = vpack.c.bf16 %v1364, %v1363
          %v1408 = vpack.c.bf16 %v1366, %v1365
          %v1409 = vpack.c.bf16 %v1368, %v1367
          %v1410 = vpack.c.bf16 %v1370, %v1369
          %v1411 = vpack.c.bf16 %v1372, %v1371
          %v1412 = vpack.c.bf16 %v1374, %v1373
          %v1413 = vpack.c.bf16 %v1376, %v1375
          %v1414 = vpack.c.bf16 %v1378, %v1377
          %v1415 = vpack.c.bf16 %v1380, %v1379
          %v1416 = vpack.c.bf16 %v1382, %v1381
          %v1417 = vpack.c.bf16 %v1384, %v1383
          %v1418 = vpack.c.bf16 %v1386, %v1385
          %v1451 = vunpack.c.l.b16 %v1387
          %v1452 = vunpack.c.h.b16 %v1387
          %v1453 = vunpack.c.l.b16 %v1388
          %v1454 = vunpack.c.h.b16 %v1388
          %v1455 = vunpack.c.l.b16 %v1389
          %v1456 = vunpack.c.h.b16 %v1389
          %v1457 = vunpack.c.l.b16 %v1390
          %v1458 = vunpack.c.h.b16 %v1390
          %v1459 = vunpack.c.l.b16 %v1391
          %v1460 = vunpack.c.h.b16 %v1391
          %v1461 = vunpack.c.l.b16 %v1392
          %v1462 = vunpack.c.h.b16 %v1392
          %v1463 = vunpack.c.l.b16 %v1393
          %v1464 = vunpack.c.h.b16 %v1393
          %v1465 = vunpack.c.l.b16 %v1394
          %v1466 = vunpack.c.h.b16 %v1394
          %v1467 = vunpack.c.l.b16 %v1395
          %v1468 = vunpack.c.h.b16 %v1395
          %v1469 = vunpack.c.l.b16 %v1396
          %v1470 = vunpack.c.h.b16 %v1396
          %v1471 = vunpack.c.l.b16 %v1397
          %v1472 = vunpack.c.h.b16 %v1397
          %v1473 = vunpack.c.l.b16 %v1398
          %v1474 = vunpack.c.h.b16 %v1398
          %v1475 = vunpack.c.l.b16 %v1399
          %v1476 = vunpack.c.h.b16 %v1399
          %v1477 = vunpack.c.l.b16 %v1400
          %v1478 = vunpack.c.h.b16 %v1400
          %v1479 = vunpack.c.l.b16 %v1401
          %v1480 = vunpack.c.h.b16 %v1401
          %v1481 = vunpack.c.l.b16 %v1402
          %v1482 = vunpack.c.h.b16 %v1402
          %v1483 = vunpack.c.l.b16 %v1403
          %v1484 = vunpack.c.h.b16 %v1403
          %v1485 = vunpack.c.l.b16 %v1404
          %v1486 = vunpack.c.h.b16 %v1404
          %v1487 = vunpack.c.l.b16 %v1405
          %v1488 = vunpack.c.h.b16 %v1405
          %v1489 = vunpack.c.l.b16 %v1406
          %v1490 = vunpack.c.h.b16 %v1406
          %v1491 = vunpack.c.l.b16 %v1407
          %v1492 = vunpack.c.h.b16 %v1407
          %v1493 = vunpack.c.l.b16 %v1408
          %v1494 = vunpack.c.h.b16 %v1408
          %v1495 = vunpack.c.l.b16 %v1409
          %v1496 = vunpack.c.h.b16 %v1409
          %v1497 = vunpack.c.l.b16 %v1410
          %v1498 = vunpack.c.h.b16 %v1410
          %v1499 = vunpack.c.l.b16 %v1411
          %v1500 = vunpack.c.h.b16 %v1411
          %v1501 = vunpack.c.l.b16 %v1412
          %v1502 = vunpack.c.h.b16 %v1412
          %v1503 = vunpack.c.l.b16 %v1413
          %v1504 = vunpack.c.h.b16 %v1413
          %v1505 = vunpack.c.l.b16 %v1414
          %v1506 = vunpack.c.h.b16 %v1414
          %v1507 = vunpack.c.l.b16 %v1415
          %v1508 = vunpack.c.h.b16 %v1415
          %v1509 = vunpack.c.l.b16 %v1416
          %v1510 = vunpack.c.h.b16 %v1416
          %v1511 = vunpack.c.l.b16 %v1417
          %v1512 = vunpack.c.h.b16 %v1417
          %v1513 = vunpack.c.l.b16 %v1418
          %v1514 = vunpack.c.h.b16 %v1418
          %v1515 = vpack.c.b16 %v1451, %v1451
          %v1516 = vpack.c.b16 %v1452, %v1452
          %v1517 = vpack.c.b16 %v1453, %v1453
          %v1518 = vpack.c.b16 %v1454, %v1454
          %v1519 = vpack.c.b16 %v1455, %v1455
          %v1520 = vpack.c.b16 %v1456, %v1456
          %v1521 = vpack.c.b16 %v1457, %v1457
          %v1522 = vpack.c.b16 %v1458, %v1458
          %v1523 = vpack.c.b16 %v1459, %v1459
          %v1524 = vpack.c.b16 %v1460, %v1460
          %v1525 = vpack.c.b16 %v1461, %v1461
          %v1526 = vpack.c.b16 %v1462, %v1462
          %v1527 = vpack.c.b16 %v1463, %v1463
          %v1528 = vpack.c.b16 %v1464, %v1464
          %v1529 = vpack.c.b16 %v1465, %v1465
          %v1530 = vpack.c.b16 %v1466, %v1466
          %v1531 = vpack.c.b16 %v1467, %v1467
          %v1532 = vpack.c.b16 %v1468, %v1468
          %v1533 = vpack.c.b16 %v1469, %v1469
          %v1534 = vpack.c.b16 %v1470, %v1470
          %v1535 = vpack.c.b16 %v1471, %v1471
          %v1536 = vpack.c.b16 %v1472, %v1472
          %v1537 = vpack.c.b16 %v1473, %v1473
          %v1538 = vpack.c.b16 %v1474, %v1474
          %v1539 = vpack.c.b16 %v1475, %v1475
          %v1540 = vpack.c.b16 %v1476, %v1476
          %v1541 = vpack.c.b16 %v1477, %v1477
          %v1542 = vpack.c.b16 %v1478, %v1478
          %v1543 = vpack.c.b16 %v1479, %v1479
          %v1544 = vpack.c.b16 %v1480, %v1480
          %v1545 = vpack.c.b16 %v1481, %v1481
          %v1546 = vpack.c.b16 %v1482, %v1482
          %v1547 = vpack.c.b16 %v1483, %v1483
          %v1548 = vpack.c.b16 %v1484, %v1484
          %v1549 = vpack.c.b16 %v1485, %v1485
          %v1550 = vpack.c.b16 %v1486, %v1486
          %v1551 = vpack.c.b16 %v1487, %v1487
          %v1552 = vpack.c.b16 %v1488, %v1488
          %v1553 = vpack.c.b16 %v1489, %v1489
          %v1554 = vpack.c.b16 %v1490, %v1490
          %v1555 = vpack.c.b16 %v1491, %v1491
          %v1556 = vpack.c.b16 %v1492, %v1492
          %v1557 = vpack.c.b16 %v1493, %v1493
          %v1558 = vpack.c.b16 %v1494, %v1494
          %v1559 = vpack.c.b16 %v1495, %v1495
          %v1560 = vpack.c.b16 %v1496, %v1496
          %v1561 = vpack.c.b16 %v1497, %v1497
          %v1562 = vpack.c.b16 %v1498, %v1498
          %v1563 = vpack.c.b16 %v1499, %v1499
          %v1564 = vpack.c.b16 %v1500, %v1500
          %v1565 = vpack.c.b16 %v1501, %v1501
          %v1566 = vpack.c.b16 %v1502, %v1502
          %v1567 = vpack.c.b16 %v1503, %v1503
          %v1568 = vpack.c.b16 %v1504, %v1504
          %v1569 = vpack.c.b16 %v1505, %v1505
          %v1570 = vpack.c.b16 %v1506, %v1506
          %v1571 = vpack.c.b16 %v1507, %v1507
          %v1572 = vpack.c.b16 %v1508, %v1508
          %v1573 = vpack.c.b16 %v1509, %v1509
          %v1574 = vpack.c.b16 %v1510, %v1510
          %v1575 = vpack.c.b16 %v1511, %v1511
          %v1576 = vpack.c.b16 %v1512, %v1512
          %v1577 = vpack.c.b16 %v1513, %v1513
          %v1578 = vpack.c.b16 %v1514, %v1514
          %1643 = vst [vmem:[%s246] sm:$0xf] %v1515
          %1644 = vst [vmem:[%s246 + $0x4] sm:$0xf] %v1516
          %1645 = vst [vmem:[%s246 + $0x8] sm:$0xf] %v1517
          %1646 = vst [vmem:[%s246 + $0xc] sm:$0xf] %v1518
          %1647 = vst [vmem:[%s246 + $0x10] sm:$0xf] %v1519
          %1648 = vst [vmem:[%s246 + $0x14] sm:$0xf] %v1520
          %1649 = vst [vmem:[%s246 + $0x18] sm:$0xf] %v1521
          %1650 = vst [vmem:[%s246 + $0x1c] sm:$0xf] %v1522
          %1651 = vst [vmem:[%s246 + $0x20] sm:$0xf] %v1523
          %1652 = vst [vmem:[%s246 + $0x24] sm:$0xf] %v1524
          %1653 = vst [vmem:[%s246 + $0x28] sm:$0xf] %v1525
          %1654 = vst [vmem:[%s246 + $0x2c] sm:$0xf] %v1526
          %1655 = vst [vmem:[%s246 + $0x30] sm:$0xf] %v1527
          %1656 = vst [vmem:[%s246 + $0x34] sm:$0xf] %v1528
          %1657 = vst [vmem:[%s246 + $0x38] sm:$0xf] %v1529
          %1658 = vst [vmem:[%s246 + $0x3c] sm:$0xf] %v1530
          %1659 = vst [vmem:[%s246 + $0x40] sm:$0xf] %v1531
          %1660 = vst [vmem:[%s246 + $0x44] sm:$0xf] %v1532
          %1661 = vst [vmem:[%s246 + $0x48] sm:$0xf] %v1533
          %1662 = vst [vmem:[%s246 + $0x4c] sm:$0xf] %v1534
          %1663 = vst [vmem:[%s246 + $0x50] sm:$0xf] %v1535
          %1664 = vst [vmem:[%s246 + $0x54] sm:$0xf] %v1536
          %1665 = vst [vmem:[%s246 + $0x58] sm:$0xf] %v1537
          %1666 = vst [vmem:[%s246 + $0x5c] sm:$0xf] %v1538
          %1667 = vst [vmem:[%s246 + $0x60] sm:$0xf] %v1539
          %1668 = vst [vmem:[%s246 + $0x64] sm:$0xf] %v1540
          %1669 = vst [vmem:[%s246 + $0x68] sm:$0xf] %v1541
          %1670 = vst [vmem:[%s246 + $0x6c] sm:$0xf] %v1542
          %1671 = vst [vmem:[%s246 + $0x70] sm:$0xf] %v1543
          %1672 = vst [vmem:[%s246 + $0x74] sm:$0xf] %v1544
          %1673 = vst [vmem:[%s246 + $0x78] sm:$0xf] %v1545
          %1674 = vst [vmem:[%s246 + $0x7c] sm:$0xf] %v1546
          %1675 = vst [vmem:[%s246 + $0x80] sm:$0xf] %v1547
          %1676 = vst [vmem:[%s246 + $0x84] sm:$0xf] %v1548
          %1677 = vst [vmem:[%s246 + $0x88] sm:$0xf] %v1549
          %1678 = vst [vmem:[%s246 + $0x8c] sm:$0xf] %v1550
          %1679 = vst [vmem:[%s246 + $0x90] sm:$0xf] %v1551
          %1680 = vst [vmem:[%s246 + $0x94] sm:$0xf] %v1552
          %1681 = vst [vmem:[%s246 + $0x98] sm:$0xf] %v1553
          %1682 = vst [vmem:[%s246 + $0x9c] sm:$0xf] %v1554
          %1683 = vst [vmem:[%s246 + $0xa0] sm:$0xf] %v1555
          %1684 = vst [vmem:[%s246 + $0xa4] sm:$0xf] %v1556
          %1685 = vst [vmem:[%s246 + $0xa8] sm:$0xf] %v1557
          %1686 = vst [vmem:[%s246 + $0xac] sm:$0xf] %v1558
          %1687 = vst [vmem:[%s246 + $0xb0] sm:$0xf] %v1559
          %1688 = vst [vmem:[%s246 + $0xb4] sm:$0xf] %v1560
          %1689 = vst [vmem:[%s246 + $0xb8] sm:$0xf] %v1561
          %1690 = vst [vmem:[%s246 + $0xbc] sm:$0xf] %v1562
          %1691 = vst [vmem:[%s246 + $0xc0] sm:$0xf] %v1563
          %1692 = vst [vmem:[%s246 + $0xc4] sm:$0xf] %v1564
          %1693 = vst [vmem:[%s246 + $0xc8] sm:$0xf] %v1565
          %1694 = vst [vmem:[%s246 + $0xcc] sm:$0xf] %v1566
          %1695 = vst [vmem:[%s246 + $0xd0] sm:$0xf] %v1567
          %1696 = vst [vmem:[%s246 + $0xd4] sm:$0xf] %v1568
          %1697 = vst [vmem:[%s246 + $0xd8] sm:$0xf] %v1569
          %1698 = vst [vmem:[%s246 + $0xdc] sm:$0xf] %v1570
          %1699 = vst [vmem:[%s246 + $0xe0] sm:$0xf] %v1571
          %1700 = vst [vmem:[%s246 + $0xe4] sm:$0xf] %v1572
          %1701 = vst [vmem:[%s246 + $0xe8] sm:$0xf] %v1573
          %1702 = vst [vmem:[%s246 + $0xec] sm:$0xf] %v1574
          %1703 = vst [vmem:[%s246 + $0xf0] sm:$0xf] %v1575
          %1704 = vst [vmem:[%s246 + $0xf4] sm:$0xf] %v1576
          %1705 = vst [vmem:[%s246 + $0xf8] sm:$0xf] %v1577
          %1706 = vst [vmem:[%s246 + $0xfc] sm:$0xf] %v1578
          %v1707 = vadd.f32 %v1323, %v1324
          %v1708 = vadd.f32 %v1707, %v1325
          %v1709 = vadd.f32 %v1708, %v1326
          %v1710 = vadd.f32 %v1709, %v1327
          %v1711 = vadd.f32 %v1710, %v1328
          %v1712 = vadd.f32 %v1711, %v1329
          %v1713 = vadd.f32 %v1712, %v1330
          %v1714 = vadd.f32 %v1713, %v1331
          %v1715 = vadd.f32 %v1714, %v1332
          %v1716 = vadd.f32 %v1715, %v1333
          %v1717 = vadd.f32 %v1716, %v1334
          %v1718 = vadd.f32 %v1717, %v1335
          %v1719 = vadd.f32 %v1718, %v1336
          %v1720 = vadd.f32 %v1719, %v1337
          %v1721 = vadd.f32 %v1720, %v1338
          %v1722 = vadd.f32 %v1721, %v1339
          %v1723 = vadd.f32 %v1722, %v1340
          %v1724 = vadd.f32 %v1723, %v1341
          %v1725 = vadd.f32 %v1724, %v1342
          %v1726 = vadd.f32 %v1725, %v1343
          %v1727 = vadd.f32 %v1726, %v1344
          %v1728 = vadd.f32 %v1727, %v1345
          %v1729 = vadd.f32 %v1728, %v1346
          %v1730 = vadd.f32 %v1729, %v1347
          %v1731 = vadd.f32 %v1730, %v1348
          %v1732 = vadd.f32 %v1731, %v1349
          %v1733 = vadd.f32 %v1732, %v1350
          %v1734 = vadd.f32 %v1733, %v1351
          %v1735 = vadd.f32 %v1734, %v1352
          %v1736 = vadd.f32 %v1735, %v1353
          %v1737 = vadd.f32 %v1736, %v1354
          %v1738 = vadd.f32 %v1737, %v1355
          %v1739 = vadd.f32 %v1738, %v1356
          %v1740 = vadd.f32 %v1739, %v1357
          %v1741 = vadd.f32 %v1740, %v1358
          %v1742 = vadd.f32 %v1741, %v1359
          %v1743 = vadd.f32 %v1742, %v1360
          %v1744 = vadd.f32 %v1743, %v1361
          %v1745 = vadd.f32 %v1744, %v1362
          %v1746 = vadd.f32 %v1745, %v1363
          %v1747 = vadd.f32 %v1746, %v1364
          %v1748 = vadd.f32 %v1747, %v1365
          %v1749 = vadd.f32 %v1748, %v1366
          %v1750 = vadd.f32 %v1749, %v1367
          %v1751 = vadd.f32 %v1750, %v1368
          %v1752 = vadd.f32 %v1751, %v1369
          %v1753 = vadd.f32 %v1752, %v1370
          %v1754 = vadd.f32 %v1753, %v1371
          %v1755 = vadd.f32 %v1754, %v1372
          %v1756 = vadd.f32 %v1755, %v1373
          %v1757 = vadd.f32 %v1756, %v1374
          %v1758 = vadd.f32 %v1757, %v1375
          %v1759 = vadd.f32 %v1758, %v1376
          %v1760 = vadd.f32 %v1759, %v1377
          %v1761 = vadd.f32 %v1760, %v1378
          %v1762 = vadd.f32 %v1761, %v1379
          %v1763 = vadd.f32 %v1762, %v1380
          %v1764 = vadd.f32 %v1763, %v1381
          %v1765 = vadd.f32 %v1764, %v1382
          %v1766 = vadd.f32 %v1765, %v1383
          %v1767 = vadd.f32 %v1766, %v1384
          %v1768 = vadd.f32 %v1767, %v1385
          %v1769 = vadd.f32 %v1768, %v1386
          %v1770 = vrot.slane %v1769, 4
          %v1771 = vadd.f32 %v1769, %v1770
          %v1772 = vrot.slane %v1771, 2
          %v1773 = vadd.f32 %v1771, %v1772
          %v1774 = vrot.slane %v1773, 1
          %v1775 = vadd.f32 %v1773, %v1774
          %v1776 = vmul.f32 %v1323, %v1323
          %v1777 = vmul.f32 %v1324, %v1324
          %v1778 = vmul.f32 %v1325, %v1325
          %v1779 = vmul.f32 %v1326, %v1326
          %v1780 = vmul.f32 %v1327, %v1327
          %v1781 = vmul.f32 %v1328, %v1328
          %v1782 = vmul.f32 %v1329, %v1329
          %v1783 = vmul.f32 %v1330, %v1330
          %v1784 = vmul.f32 %v1331, %v1331
          %v1785 = vmul.f32 %v1332, %v1332
          %v1786 = vmul.f32 %v1333, %v1333
          %v1787 = vmul.f32 %v1334, %v1334
          %v1788 = vmul.f32 %v1335, %v1335
          %v1789 = vmul.f32 %v1336, %v1336
          %v1790 = vmul.f32 %v1337, %v1337
          %v1791 = vmul.f32 %v1338, %v1338
          %v1792 = vmul.f32 %v1339, %v1339
          %v1793 = vmul.f32 %v1340, %v1340
          %v1794 = vmul.f32 %v1341, %v1341
          %v1795 = vmul.f32 %v1342, %v1342
          %v1796 = vmul.f32 %v1343, %v1343
          %v1797 = vmul.f32 %v1344, %v1344
          %v1798 = vmul.f32 %v1345, %v1345
          %v1799 = vmul.f32 %v1346, %v1346
          %v1800 = vmul.f32 %v1347, %v1347
          %v1801 = vmul.f32 %v1348, %v1348
          %v1802 = vmul.f32 %v1349, %v1349
          %v1803 = vmul.f32 %v1350, %v1350
          %v1804 = vmul.f32 %v1351, %v1351
          %v1805 = vmul.f32 %v1352, %v1352
          %v1806 = vmul.f32 %v1353, %v1353
          %v1807 = vmul.f32 %v1354, %v1354
          %v1808 = vmul.f32 %v1355, %v1355
          %v1809 = vmul.f32 %v1356, %v1356
          %v1810 = vmul.f32 %v1357, %v1357
          %v1811 = vmul.f32 %v1358, %v1358
          %v1812 = vmul.f32 %v1359, %v1359
          %v1813 = vmul.f32 %v1360, %v1360
          %v1814 = vmul.f32 %v1361, %v1361
          %v1815 = vmul.f32 %v1362, %v1362
          %v1816 = vmul.f32 %v1363, %v1363
          %v1817 = vmul.f32 %v1364, %v1364
          %v1818 = vmul.f32 %v1365, %v1365
          %v1819 = vmul.f32 %v1366, %v1366
          %v1820 = vmul.f32 %v1367, %v1367
          %v1821 = vmul.f32 %v1368, %v1368
          %v1822 = vmul.f32 %v1369, %v1369
          %v1823 = vmul.f32 %v1370, %v1370
          %v1824 = vmul.f32 %v1371, %v1371
          %v1825 = vmul.f32 %v1372, %v1372
          %v1826 = vmul.f32 %v1373, %v1373
          %v1827 = vmul.f32 %v1374, %v1374
          %v1828 = vmul.f32 %v1375, %v1375
          %v1829 = vmul.f32 %v1376, %v1376
          %v1830 = vmul.f32 %v1377, %v1377
          %v1831 = vmul.f32 %v1378, %v1378
          %v1832 = vmul.f32 %v1379, %v1379
          %v1833 = vmul.f32 %v1380, %v1380
          %v1834 = vmul.f32 %v1381, %v1381
          %v1835 = vmul.f32 %v1382, %v1382
          %v1836 = vmul.f32 %v1383, %v1383
          %v1837 = vmul.f32 %v1384, %v1384
          %v1838 = vmul.f32 %v1385, %v1385
          %v1839 = vmul.f32 %v1386, %v1386
          %v1840 = vadd.f32 %v1776, %v1777
          %v1841 = vadd.f32 %v1840, %v1778
          %v1842 = vadd.f32 %v1841, %v1779
          %v1843 = vadd.f32 %v1842, %v1780
          %v1844 = vadd.f32 %v1843, %v1781
          %v1845 = vadd.f32 %v1844, %v1782
          %v1846 = vadd.f32 %v1845, %v1783
          %v1847 = vadd.f32 %v1846, %v1784
          %v1848 = vadd.f32 %v1847, %v1785
          %v1849 = vadd.f32 %v1848, %v1786
          %v1850 = vadd.f32 %v1849, %v1787
          %v1851 = vadd.f32 %v1850, %v1788
          %v1852 = vadd.f32 %v1851, %v1789
          %v1853 = vadd.f32 %v1852, %v1790
          %v1854 = vadd.f32 %v1853, %v1791
          %v1855 = vadd.f32 %v1854, %v1792
          %v1856 = vadd.f32 %v1855, %v1793
          %v1857 = vadd.f32 %v1856, %v1794
          %v1858 = vadd.f32 %v1857, %v1795
          %v1859 = vadd.f32 %v1858, %v1796
          %v1860 = vadd.f32 %v1859, %v1797
          %v1861 = vadd.f32 %v1860, %v1798
          %v1862 = vadd.f32 %v1861, %v1799
          %v1863 = vadd.f32 %v1862, %v1800
          %v1864 = vadd.f32 %v1863, %v1801
          %v1865 = vadd.f32 %v1864, %v1802
          %v1866 = vadd.f32 %v1865, %v1803
          %v1867 = vadd.f32 %v1866, %v1804
          %v1868 = vadd.f32 %v1867, %v1805
          %v1869 = vadd.f32 %v1868, %v1806
          %v1870 = vadd.f32 %v1869, %v1807
          %v1871 = vadd.f32 %v1870, %v1808
          %v1872 = vadd.f32 %v1871, %v1809
          %v1873 = vadd.f32 %v1872, %v1810
          %v1874 = vadd.f32 %v1873, %v1811
          %v1875 = vadd.f32 %v1874, %v1812
          %v1876 = vadd.f32 %v1875, %v1813
          %v1877 = vadd.f32 %v1876, %v1814
          %v1878 = vadd.f32 %v1877, %v1815
          %v1879 = vadd.f32 %v1878, %v1816
          %v1880 = vadd.f32 %v1879, %v1817
          %v1881 = vadd.f32 %v1880, %v1818
          %v1882 = vadd.f32 %v1881, %v1819
          %v1883 = vadd.f32 %v1882, %v1820
          %v1884 = vadd.f32 %v1883, %v1821
          %v1885 = vadd.f32 %v1884, %v1822
          %v1886 = vadd.f32 %v1885, %v1823
          %v1887 = vadd.f32 %v1886, %v1824
          %v1888 = vadd.f32 %v1887, %v1825
          %v1889 = vadd.f32 %v1888, %v1826
          %v1890 = vadd.f32 %v1889, %v1827
          %v1891 = vadd.f32 %v1890, %v1828
          %v1892 = vadd.f32 %v1891, %v1829
          %v1893 = vadd.f32 %v1892, %v1830
          %v1894 = vadd.f32 %v1893, %v1831
          %v1895 = vadd.f32 %v1894, %v1832
          %v1896 = vadd.f32 %v1895, %v1833
          %v1897 = vadd.f32 %v1896, %v1834
          %v1898 = vadd.f32 %v1897, %v1835
          %v1899 = vadd.f32 %v1898, %v1836
          %v1900 = vadd.f32 %v1899, %v1837
          %v1901 = vadd.f32 %v1900, %v1838
          %v1902 = vadd.f32 %v1901, %v1839
          %v1903 = vrot.slane %v1902, 4
          %v1904 = vadd.f32 %v1902, %v1903
          %v1905 = vrot.slane %v1904, 2
          %v1906 = vadd.f32 %v1904, %v1905
          %v1907 = vrot.slane %v1906, 1
          %v1908 = vadd.f32 %v1906, %v1907
          %v1909 = vlaneseq
          %v1910 = vshrl.u32 %v1909, 7
          %vm1911 = vcmp.eq.s32.totalorder %v1910, 0
          %v1912 = vsel %vm1911, %v1775, %v1908
          %1913 = vst [vmem:[%s253] sm:$0x3] %v1912
        $region44: #{tpu_custom_call.1} parent=27 // pred_fallthru
          _
        %s1914 = sand.u32 %s110, 1
        %s1915 = scalar_lea.sflag [#allocation5], %s1914
        %s1916 = sand.u32 %s110, 1
        %s1917 = smul.addr %s1916, 256
        %s1918 = scalar_lea.vmem [#allocation8], %s1917
        %s1919 = sand.u32 %s138, 1
        %s1920 = scalar_lea.sflag [#allocation10], %s1919
        %s1921 = sand.u32 %s138, 1
        %s1922 = smul.addr %s1921, 2
        %s1923 = scalar_lea.vmem [#allocation9], %s1922
        // Predicated region
        $region45: #{tpu_custom_call.1} parent=27 // pred_check
          %p1924 = pneg %p120
        $region46: #{tpu_custom_call.1} parent=27 // pred_check_branch
          %1926 = sbr.rel (%p1924) target = $region48
        $region47: #{tpu_custom_call.1} parent=27 // pred_region
          %s1927 = smul.u32 64, %s30
          %s1929 = ssub.s32 4096, 4096
          %1930 = vsyncadd %s1915, %s1929
          %s1931 = sadd.s32 %s31, %s1927
          %s1932 = smul.addr %s1931, 64
          %s1933 = scalar_lea.hbm %s2, %s1932
          %s1934 = sshll.u32 %s1918, 4
          %s1935 = int_to_ptr.vmem [resolvable:$true] %s1934
          %1940 = dma.vmem_to_hbm [thread:$0]  %s1935, 4096, %s1933, %s1915, 64, 64, 4
        $region48: #{tpu_custom_call.1} parent=27 // pred_fallthru
          _
        // Predicated region
        $region49: #{tpu_custom_call.1} parent=27 // pred_check
          %p1941 = pneg %p148
        $region50: #{tpu_custom_call.1} parent=27 // pred_check_branch
          %1943 = sbr.rel (%p1941) target = $region52
        $region51: #{tpu_custom_call.1} parent=27 // pred_region
          %s1945 = ssub.s32 32, 32
          %1946 = vsyncadd %s1920, %s1945
          %s1947 = sadd.s32 %s31, %s30
          %s1948 = smul.addr %s1947, 32
          %s1949 = scalar_lea.hbm %s3, %s1948
          %s1951 = sshll.u32 %s1923, 4
          %s1952 = int_to_ptr.vmem [resolvable:$true] %s1951
          %1954 = dma.vmem_to_hbm [thread:$0]  %s1952, 32, %s1949, %s1920
        $region52: #{tpu_custom_call.1} parent=27 // pred_fallthru
          _
      $region28: #{tpu_custom_call.1} parent=5 // pred_fallthru
        _
      %p1955 = scmp.le.s32.totalorder 2, %s20
      // Predicated region
      $region53: #{tpu_custom_call.1} parent=5 // pred_check
        %p1956 = pneg %p1955
      $region54: #{tpu_custom_call.1} parent=5 // pred_check_branch
        %1958 = sbr.rel (%p1956) target = $region56
      $region55: #{tpu_custom_call.1} parent=5 // pred_region
        %s1959 = ssub.s32 %s20, 2
        // Predicated region
        $region57: #{tpu_custom_call.1} parent=55 // pred_check
          %p1960 = pneg %p126
        $region58: #{tpu_custom_call.1} parent=55 // pred_check_branch
          %1962 = sbr.rel (%p1960) target = $region60
        $region59: #{tpu_custom_call.1} parent=55 // pred_region
          %s1963 = sand.u32 %s111, 1
          %s1964 = scalar_lea.sflag [#allocation5], %s1963
          %s1965 = sand.u32 %s111, 1
          %s1966 = smul.addr %s1965, 256
          %s1967 = scalar_lea.vmem [#allocation8], %s1966
          %1968 = dma.done %s1964, 4096
        $region60: #{tpu_custom_call.1} parent=55 // pred_fallthru
          _
        // Predicated region
        $region61: #{tpu_custom_call.1} parent=55 // pred_check
          %p1969 = pneg %p154
        $region62: #{tpu_custom_call.1} parent=55 // pred_check_branch
          %1971 = sbr.rel (%p1969) target = $region64
        $region63: #{tpu_custom_call.1} parent=55 // pred_region
          %s1972 = sand.u32 %s139, 1
          %s1973 = scalar_lea.sflag [#allocation10], %s1972
          %s1974 = sand.u32 %s139, 1
          %s1975 = smul.addr %s1974, 2
          %s1976 = scalar_lea.vmem [#allocation9], %s1975
          %1977 = dma.done %s1973, 32
        $region64: #{tpu_custom_call.1} parent=55 // pred_fallthru
          _
      $region56: #{tpu_custom_call.1} parent=5 // pred_fallthru
        _
    $region6: #{tpu_custom_call.1} parent=1 // loop_footer
      %s24 = sadd.s32 1, %s20
    $region7: #{tpu_custom_call.1} parent=1 // loop_footer_branch
      %19 = sbr.rel target = $region3
    $region8: #{tpu_custom_call.1} parent=1 // loop_exit
      _
    %1978 = vsyncpa [#allocation4], 1
    %s1979 = scalar_lea.sflag [#allocation4], 1
    %1980 = vsyncpa %s1979, 1
    %1981 = vsyncpa [#allocation7], 1
    %1982 = vsyncpa [#allocation5], 1
    %s1983 = scalar_lea.sflag [#allocation5], 1
    %1984 = vsyncpa %s1983, 1
    %1985 = vsyncpa [#allocation10], 1
    %s1986 = scalar_lea.sflag [#allocation10], 1
    %1987 = vsyncpa %s1986, 1

</llo_original>
